<compile_context>
chip_gen: v7x
topology: tpu7x:2x2x1
jax: 0.10.0
libtpu: 0.0.40
codegen_flags: <defaults>
</compile_context>

<pallas_src>
import functools

import jax
import jax.numpy as jnp
from jax.experimental import pallas as pl
from jax.experimental.pallas import tpu as pltpu

NUM_ATOM_TYPES = 118
EMBED_DIM = 16
NODE_IN = EMBED_DIM + 1          # atom embedding + electronegativity
IN_EDGE_DIM = 4
LATENT_FEAT = 24
LATENT_EDGE = 12
HIDDEN2 = 36
OUT_DIM = 64
NEG_SLOPE = 0.2                  # GATv2Conv default negative_slope


def _vmem_limit_bytes():
    """~100 MiB on v5e/v6e, ~56 MiB on v7x (8 MiB headroom under physical VMEM)."""
    try:
        cap = int(pltpu.get_tpu_info().vmem_capacity_bytes)
        return max(32 << 20, min(cap - (8 << 20), 100 << 20))
    except Exception:
        return 48 << 20


def graph_encoder_kernel(offs, node_ref, nmask_ref, raw_ref, mask2d_ref, slab_ref,
                         out_ref):
    """One graph per grid step: node encoder -> GATv2+relu x2 -> mean-pool -> final linear."""
    M = mask2d_ref.shape[0]

    def p(name):                      # static slice into the packed parameter slab
        r0, nr, nc = offs[name]
        return slab_ref[r0:r0 + nr, :nc]

    # ---- node encoder (embedding already gathered in wrapper) ----
    h = (jnp.dot(node_ref[...], p("w_node"), preferred_element_type=jnp.float32)
         + p("b_node"))                                                     # [M, 24]

    # ---- dense edge bookkeeping (edge_dense folded into lin_edge host-side) ----
    mask2d = mask2d_ref[...]                                                # [M, M], no self loops
    raw3 = raw_ref[...]                                                     # [M, M, 4]
    raw_flat = raw3.reshape(M * M, IN_EDGE_DIM)                             # layout-preserving (M % 8 == 0)
    raw_sum = jnp.sum(raw3, axis=1)                                         # [M, 4] sum over incoming edges
    cnt = jnp.sum(mask2d, axis=1, keepdims=True)                            # incoming-edge count per dst
    has_edge = (cnt > 0).astype(jnp.float32)
    inv_cnt = 1.0 / jnp.maximum(cnt, 1.0)

    ii = jax.lax.broadcasted_iota(jnp.int32, (M, M), 0)
    jj = jax.lax.broadcasted_iota(jnp.int32, (M, M), 1)
    eye = ii == jj

    def edge_feats(wname, bname):
        we, be = p(wname), p(bname)
        c = offs[wname][2]
        # lin_edge(edge_dense(raw)) on edge slots; non-edge / diag values are never used.
        ge = (jnp.dot(raw_flat, we, preferred_element_type=jnp.float32)
              + be).reshape(M, M, c)                                        # [M, M, c]
        # add_self_loops(fill_value='mean'): mean latent edge attr of incoming edges.
        diag = (jnp.dot(raw_sum, we, preferred_element_type=jnp.float32) * inv_cnt
                + be) * has_edge                                            # [M, c]
        return ge, diag

    def gatv2(x, ge, diag_e, wl, bl, wr, br, att, bias):
        gl = jnp.dot(x, wl, preferred_element_type=jnp.float32) + bl        # lin_l (source)  [M, C]
        gr = jnp.dot(x, wr, preferred_element_type=jnp.float32) + br        # lin_r (target)  [M, C]
        # e_{i<-j} = att . leaky_relu(x_i + x_j + e_ij)
        s = gr[:, None, :] + gl[None, :, :] + ge                            # [M_dst, M_src, C]
        s = jnp.where(s > 0, s, NEG_SLOPE * s)
        logits = jnp.sum(s * att, axis=-1)                                  # [M, M]
        # self-loop logit computed per-node (diagonal patch; ge's diagonal is unused)
        ss = gr + gl + diag_e
        ss = jnp.where(ss > 0, ss, NEG_SLOPE * ss)
        self_logit = jnp.sum(ss * att, axis=-1, keepdims=True)              # [M, 1]
        logits = jnp.where(eye, self_logit,
                           jnp.where(mask2d > 0, logits, jnp.float32(-1e30)))
        mx = jnp.max(logits, axis=1, keepdims=True)
        pexp = jnp.exp(logits - mx)                                         # masked entries underflow to 0
        alpha = pexp * pl.reciprocal(jnp.sum(pexp, axis=1, keepdims=True), approx=True)
        o = jnp.dot(alpha, gl, preferred_element_type=jnp.float32) + bias
        return jnp.maximum(o, 0.0)                                          # torch.relu fused in

    ge1, de1 = edge_feats("we1", "be1")
    h = gatv2(h, ge1, de1, p("wl1"), p("bl1"), p("wr1"), p("br1"), p("att1"), p("bias1"))
    ge2, de2 = edge_feats("we2", "be2")                                     # built lazily -> lower live VMEM
    h = gatv2(h, ge2, de2, p("wl2"), p("bl2"), p("wr2"), p("br2"), p("att2"), p("bias2"))

    # ---- global_mean_pool over the real nodes of this graph + final_layer ----
    nmask = nmask_ref[...]                                                  # [1, M]
    n_real = jnp.maximum(jnp.sum(nmask, axis=1, keepdims=True), 1.0)
    pooled = jnp.dot(nmask, h, preferred_element_type=jnp.float32) / n_real  # [1, 36]
    out_ref[...] = (jnp.dot(pooled, p("w_final"), preferred_element_type=jnp.float32)
                    + p("b_final"))


def _pack_params(params):
    """Fold edge_dense into lin_edge and pack every small weight into one [R, 128] slab."""
    c1, c2 = params["conv1"], params["conv2"]
    we1 = params["w_edge"] @ c1["we"]                           # [4, 24]
    be1 = params["b_edge"].reshape(1, -1) @ c1["we"]            # [1, 24]
    we2 = params["w_edge"] @ c2["we"]                           # [4, 36]
    be2 = params["b_edge"].reshape(1, -1) @ c2["we"]            # [1, 36]

    entries = [
        ("w_node", params["w_node"]), ("b_node", params["b_node"].reshape(1, -1)),
        ("we1", we1), ("be1", be1), ("we2", we2), ("be2", be2),
        ("wl1", c1["wl"]), ("bl1", c1["bl"]), ("wr1", c1["wr"]), ("br1", c1["br"]),
        ("att1", c1["att"]), ("bias1", c1["bias"]),
        ("wl2", c2["wl"]), ("bl2", c2["bl"]), ("wr2", c2["wr"]), ("br2", c2["br"]),
        ("att2", c2["att"]), ("bias2", c2["bias"]),
        ("w_final", params["w_final"]), ("b_final", params["b_final"].reshape(1, -1)),
    ]
    offs, blocks, row = {}, [], 0
    for name, arr in entries:
        arr = jnp.asarray(arr, jnp.float32)
        r, c = arr.shape
        offs[name] = (row, r, c)
        rp = ((r + 7) // 8) * 8                                  # 8-row (sublane) aligned regions
        blocks.append(jnp.zeros((rp, 128), jnp.float32).at[:r, :c].set(arr))
        row += rp
    return jnp.concatenate(blocks, axis=0), offs, row


@functools.partial(jax.jit, static_argnames=("num_graphs", "max_nodes"))
def graph_encoder_forward(x, edge_index, edge_attr, batch, params, *, num_graphs, max_nodes):
    B = num_graphs
    M = ((max_nodes + 7) // 8) * 8                 # per-graph node count padded to a sublane multiple
    N0 = x.shape[0]
    batch = batch.astype(jnp.int32)

    # ---- XLA glue: embedding gather + per-graph dense packing ----
    # TODO(synk): the COO -> dense-per-graph scatter and argmax/embedding gather are
    #             data-dependent indexing with no clean BlockSpec form; kept in XLA.
    atom_idx = jnp.argmax(x[:, :NUM_ATOM_TYPES], axis=1)
    emb_feats = jnp.take(params["emb"].astype(jnp.float32), atom_idx, axis=0)       # [N0, 16]
    node_in = jnp.concatenate(
        [emb_feats, x[:, NUM_ATOM_TYPES:NUM_ATOM_TYPES + 1].astype(jnp.float32)], axis=1)

    first = jnp.searchsorted(batch, jnp.arange(B, dtype=jnp.int32))                 # first node of each graph
    pos = jnp.arange(N0, dtype=jnp.int32) - first[batch]                            # node position within graph
    node_feats = jnp.zeros((B, M, NODE_IN), jnp.float32).at[batch, pos].set(node_in)
    node_mask = jnp.zeros((B, M), jnp.float32).at[batch, pos].set(1.0).reshape(B, 1, M)

    # edge_attr = cat([edge_attr, edge_attr]); remove_self_loops; dense per-graph scatter.
    ea2 = jnp.concatenate([edge_attr, edge_attr], axis=0).astype(jnp.float32)
    src = edge_index[0].astype(jnp.int32)
    dst = edge_index[1].astype(jnp.int32)
    g = batch[dst]
    ls = src - first[g]
    ld = dst - first[g]
    keep = (src != dst).astype(jnp.float32)
    raw_dense = jnp.zeros((B, M, M, IN_EDGE_DIM), jnp.float32).at[g, ld, ls].add(
        ea2 * keep[:, None])
    mask2d = jnp.minimum(jnp.zeros((B, M, M), jnp.float32).at[g, ld, ls].add(keep), 1.0)

    slab, offs, slab_rows = _pack_params(params)

    out = pl.pallas_call(
        functools.partial(graph_encoder_kernel, offs),
        out_shape=jax.ShapeDtypeStruct((B, 1, OUT_DIM), jnp.float32),
        grid=(B,),
        in_specs=[
            pl.BlockSpec((None, M, NODE_IN), lambda gi: (gi, 0, 0)),
            pl.BlockSpec((None, 1, M), lambda gi: (gi, 0, 0)),
            pl.BlockSpec((None, M, M, IN_EDGE_DIM), lambda gi: (gi, 0, 0, 0)),
            pl.BlockSpec((None, M, M), lambda gi: (gi, 0, 0)),
            pl.BlockSpec((slab_rows, 128), lambda gi: (0, 0)),   # params: same block -> resident
        ],
        out_specs=pl.BlockSpec((None, 1, OUT_DIM), lambda gi: (gi, 0, 0)),
        compiler_params=pltpu.CompilerParams(
            dimension_semantics=("parallel",),
            vmem_limit_bytes=_vmem_limit_bytes(),
        ),
    )(node_feats, node_mask, raw_dense, mask2d, slab)
    return out[:, 0, :]


def init_params(key):
    ks = jax.random.split(key, 21)
    w = lambda k, shape: (0.1 * jax.random.normal(k, shape)).astype(jnp.float32)

    def conv_params(keys, cin, cout):
        return {
            "wl": w(keys[0], (cin, cout)), "bl": w(keys[1], (1, cout)),
            "wr": w(keys[2], (cin, cout)), "br": w(keys[3], (1, cout)),
            "we": w(keys[4], (LATENT_EDGE, cout)),           # lin_edge (bias=False)
            "att": w(keys[5], (1, cout)),
            "bias": w(keys[6], (1, cout)),
        }

    return {
        "emb": w(ks[0], (NUM_ATOM_TYPES, EMBED_DIM)),
        "w_node": w(ks[1], (EMBED_DIM + 1, LATENT_FEAT)),
        "b_node": w(ks[2], (LATENT_FEAT,)),
        "w_edge": w(ks[3], (IN_EDGE_DIM, LATENT_EDGE)),
        "b_edge": w(ks[4], (LATENT_EDGE,)),
        "conv1": conv_params(ks[5:12], LATENT_FEAT, LATENT_FEAT),
        "conv2": conv_params(ks[12:19], LATENT_FEAT, HIDDEN2),
        "w_final": w(ks[19], (HIDDEN2, OUT_DIM)),
        "b_final": w(ks[20], (OUT_DIM,)),
    }


if __name__ == "__main__":
    key = jax.random.PRNGKey(0)
    kp, kx, ke, kea = jax.random.split(key, 4)
    params = init_params(kp)

    # 2 graphs x 8 nodes; x = [one_hot(atom_number, 118) | electronegativity]
    N, B, NODES_PER_GRAPH = 16, 2, 8
    atom_idx = jax.random.randint(kx, (N,), 0, NUM_ATOM_TYPES)
    onehot = jax.nn.one_hot(atom_idx, NUM_ATOM_TYPES, dtype=jnp.float32)
    electroneg = jax.random.uniform(ke, (N, 1), dtype=jnp.float32)
    x = jnp.concatenate([onehot, electroneg], axis=1)                 # [16, 119]

    # ring edges inside each 8-node graph; edge_index holds both directions (2E cols)
    # while edge_attr has E rows (forward duplicates it), no self loops.
    srcs, dsts = [], []
    for grp in range(B):
        base = grp * NODES_PER_GRAPH
        for i in range(NODES_PER_GRAPH):
            srcs.append(base + i)
            dsts.append(base + (i + 1) % NODES_PER_GRAPH)
    u = jnp.array(srcs, jnp.int32)
    v = jnp.array(dsts, jnp.int32)
    edge_index = jnp.stack([jnp.concatenate([u, v]), jnp.concatenate([v, u])])        # [2, 32]
    edge_attr = jax.random.uniform(kea, (u.shape[0], IN_EDGE_DIM), dtype=jnp.float32)  # [16, 4]
    batch = jnp.concatenate([jnp.zeros(NODES_PER_GRAPH, jnp.int32),
                             jnp.ones(NODES_PER_GRAPH, jnp.int32)])

    out = graph_encoder_forward(x, edge_index, edge_attr, batch, params,
                                num_graphs=B, max_nodes=NODES_PER_GRAPH)
    out = jax.block_until_ready(out)
    assert out.shape == (B, OUT_DIM) and out.dtype == jnp.float32
    print("KERNEL_OK")
</pallas_src>

<mosaic_0001>
module attributes {stable_mosaic.version = 11 : i64} {
  func.func private @main(%arg0: i32) attributes {dimension_semantics = [#tpu.dimension_semantics<core_parallel>], iteration_bounds = array<i64: 2>, tpu.core_type = #tpu.core_type<sc_scalar_subcore>, window_params = []} {
    return
  }
}

module attributes {stable_mosaic.version = 11 : i64} {
  func.func private @main(%arg0: i32) attributes {dimension_semantics = [#tpu.dimension_semantics<core_parallel>], iteration_bounds = array<i64: 2>, tpu.core_type = #tpu.core_type<sc_scalar_subcore>, window_params = []} {
    return
  }
}

module attributes {stable_mosaic.version = 11 : i64} {
  func.func @graph_encoder_kernel(%arg0: i32, %arg1: memref<1x8x17xf32, #tpu.memory_space<vmem>>, %arg2: memref<1x1x8xf32, #tpu.memory_space<vmem>>, %arg3: memref<1x8x8x4xf32, #tpu.memory_space<vmem>>, %arg4: memref<1x8x8xf32, #tpu.memory_space<vmem>>, %arg5: memref<272x128xf32, #tpu.memory_space<vmem>>, %arg6: memref<1x1x64xf32, #tpu.memory_space<vmem>>) attributes {dimension_semantics = [#tpu.dimension_semantics<parallel>], iteration_bounds = array<i64: 2>, scalar_prefetch = 0 : i64, scratch_operands = 0 : i64, tpu.core_type = #tpu.core_type<tc>, window_params = [{transform_indices = @transform_0, window_bounds = array<i64: 1, 8, 17>}, {transform_indices = @transform_1, window_bounds = array<i64: 1, 1, 8>}, {transform_indices = @transform_2, window_bounds = array<i64: 1, 8, 8, 4>}, {transform_indices = @transform_3, window_bounds = array<i64: 1, 8, 8>}, {pipeline_mode = #tpu.pipeline_mode<synchronous>, transform_indices = @transform_4, window_bounds = array<i64: 272, 128>}, {transform_indices = @transform_5, window_bounds = array<i64: 1, 1, 64>}]} {
    %c0 = arith.constant 0 : index
    %c0_0 = arith.constant 0 : index
    %c0_1 = arith.constant 0 : index
    %0 = vector.load %arg1[%c0, %c0_0, %c0_1] : memref<1x8x17xf32, #tpu.memory_space<vmem>>, vector<1x8x17xf32>
    %1 = vector.shape_cast %0 : vector<1x8x17xf32> to vector<8x17xf32>
    %c0_2 = arith.constant 0 : index
    %c0_3 = arith.constant 0 : index
    %2 = vector.load %arg5[%c0_2, %c0_3] : memref<272x128xf32, #tpu.memory_space<vmem>>, vector<17x24xf32>
    %cst = arith.constant dense<0.000000e+00> : vector<8x24xf32>
    %3 = tpu.matmul %1, %2, %cst {dimension_numbers = #tpu.dot_dimension_numbers<[1], [0], [0], [1], [0, 0, 1, 1], [], []>} : vector<8x17xf32>, vector<17x24xf32>, vector<8x24xf32> -> vector<8x24xf32>
    %c24 = arith.constant 24 : index
    %c0_4 = arith.constant 0 : index
    %4 = vector.load %arg5[%c24, %c0_4] : memref<272x128xf32, #tpu.memory_space<vmem>>, vector<1x24xf32>
    %5 = vector.broadcast %4 : vector<1x24xf32> to vector<8x24xf32>
    %6 = arith.addf %3, %5 : vector<8x24xf32>
    %c0_5 = arith.constant 0 : index
    %c0_6 = arith.constant 0 : index
    %c0_7 = arith.constant 0 : index
    %7 = vector.load %arg4[%c0_5, %c0_6, %c0_7] : memref<1x8x8xf32, #tpu.memory_space<vmem>>, vector<1x8x8xf32>
    %8 = vector.shape_cast %7 : vector<1x8x8xf32> to vector<8x8xf32>
    %c0_8 = arith.constant 0 : index
    %c0_9 = arith.constant 0 : index
    %c0_10 = arith.constant 0 : index
    %c0_11 = arith.constant 0 : index
    %9 = vector.load %arg3[%c0_8, %c0_9, %c0_10, %c0_11] : memref<1x8x8x4xf32, #tpu.memory_space<vmem>>, vector<1x8x8x4xf32>
    %10 = vector.shape_cast %9 : vector<1x8x8x4xf32> to vector<8x8x4xf32>
    %11 = vector.shape_cast %10 : vector<8x8x4xf32> to vector<64x4xf32>
    %cst_12 = arith.constant dense<0.000000e+00> : vector<8x4xf32>
    %12 = vector.multi_reduction <add>, %10, %cst_12 [1] : vector<8x8x4xf32> to vector<8x4xf32>
    %cst_13 = arith.constant dense<0.000000e+00> : vector<8xf32>
    %13 = vector.multi_reduction <add>, %8, %cst_13 [1] : vector<8x8xf32> to vector<8xf32>
    %14 = vector.shape_cast %13 : vector<8xf32> to vector<8x1xf32>
    %cst_14 = arith.constant 0.000000e+00 : f32
    %15 = vector.broadcast %cst_14 : f32 to vector<8x1xf32>
    %16 = arith.cmpf ogt, %14, %15 : vector<8x1xf32>
    %17 = arith.extui %16 : vector<8x1xi1> to vector<8x1xi32>
    %18 = arith.sitofp %17 : vector<8x1xi32> to vector<8x1xf32>
    %cst_15 = arith.constant 1.000000e+00 : f32
    %19 = vector.broadcast %cst_15 : f32 to vector<8x1xf32>
    %20 = arith.maximumf %14, %19 : vector<8x1xf32>
    %cst_16 = arith.constant 1.000000e+00 : f32
    %21 = vector.broadcast %cst_16 : f32 to vector<8x1xf32>
    %22 = arith.divf %21, %20 : vector<8x1xf32>
    %23 = tpu.iota {dimensions = array<i32: 0>} : vector<8x8xi32>
    %24 = tpu.iota {dimensions = array<i32: 1>} : vector<8x8xi32>
    %25 = arith.cmpi eq, %23, %24 : vector<8x8xi32>
    %c32 = arith.constant 32 : index
    %c0_17 = arith.constant 0 : index
    %26 = vector.load %arg5[%c32, %c0_17] : memref<272x128xf32, #tpu.memory_space<vmem>>, vector<4x24xf32>
    %c40 = arith.constant 40 : index
    %c0_18 = arith.constant 0 : index
    %27 = vector.load %arg5[%c40, %c0_18] : memref<272x128xf32, #tpu.memory_space<vmem>>, vector<1x24xf32>
    %cst_19 = arith.constant dense<0.000000e+00> : vector<64x24xf32>
    %28 = tpu.matmul %11, %26, %cst_19 {dimension_numbers = #tpu.dot_dimension_numbers<[1], [0], [0], [1], [0, 0, 1, 1], [], []>} : vector<64x4xf32>, vector<4x24xf32>, vector<64x24xf32> -> vector<64x24xf32>
    %29 = vector.broadcast %27 : vector<1x24xf32> to vector<64x24xf32>
    %30 = arith.addf %28, %29 : vector<64x24xf32>
    %31 = vector.shape_cast %30 : vector<64x24xf32> to vector<8x8x24xf32>
    %cst_20 = arith.constant dense<0.000000e+00> : vector<8x24xf32>
    %32 = tpu.matmul %12, %26, %cst_20 {dimension_numbers = #tpu.dot_dimension_numbers<[1], [0], [0], [1], [0, 0, 1, 1], [], []>} : vector<8x4xf32>, vector<4x24xf32>, vector<8x24xf32> -> vector<8x24xf32>
    %33 = vector.broadcast %22 : vector<8x1xf32> to vector<8x24xf32>
    %34 = arith.mulf %32, %33 : vector<8x24xf32>
    %35 = vector.broadcast %27 : vector<1x24xf32> to vector<8x24xf32>
    %36 = arith.addf %34, %35 : vector<8x24xf32>
    %37 = vector.broadcast %18 : vector<8x1xf32> to vector<8x24xf32>
    %38 = arith.mulf %36, %37 : vector<8x24xf32>
    %c64 = arith.constant 64 : index
    %c0_21 = arith.constant 0 : index
    %39 = vector.load %arg5[%c64, %c0_21] : memref<272x128xf32, #tpu.memory_space<vmem>>, vector<24x24xf32>
    %c88 = arith.constant 88 : index
    %c0_22 = arith.constant 0 : index
    %40 = vector.load %arg5[%c88, %c0_22] : memref<272x128xf32, #tpu.memory_space<vmem>>, vector<1x24xf32>
    %c96 = arith.constant 96 : index
    %c0_23 = arith.constant 0 : index
    %41 = vector.load %arg5[%c96, %c0_23] : memref<272x128xf32, #tpu.memory_space<vmem>>, vector<24x24xf32>
    %c120 = arith.constant 120 : index
    %c0_24 = arith.constant 0 : index
    %42 = vector.load %arg5[%c120, %c0_24] : memref<272x128xf32, #tpu.memory_space<vmem>>, vector<1x24xf32>
    %c128 = arith.constant 128 : index
    %c0_25 = arith.constant 0 : index
    %43 = vector.load %arg5[%c128, %c0_25] : memref<272x128xf32, #tpu.memory_space<vmem>>, vector<1x24xf32>
    %c136 = arith.constant 136 : index
    %c0_26 = arith.constant 0 : index
    %44 = vector.load %arg5[%c136, %c0_26] : memref<272x128xf32, #tpu.memory_space<vmem>>, vector<1x24xf32>
    %cst_27 = arith.constant dense<0.000000e+00> : vector<8x24xf32>
    %45 = tpu.matmul %6, %39, %cst_27 {dimension_numbers = #tpu.dot_dimension_numbers<[1], [0], [0], [1], [0, 0, 1, 1], [], []>} : vector<8x24xf32>, vector<24x24xf32>, vector<8x24xf32> -> vector<8x24xf32>
    %46 = vector.broadcast %40 : vector<1x24xf32> to vector<8x24xf32>
    %47 = arith.addf %45, %46 : vector<8x24xf32>
    %cst_28 = arith.constant dense<0.000000e+00> : vector<8x24xf32>
    %48 = tpu.matmul %6, %41, %cst_28 {dimension_numbers = #tpu.dot_dimension_numbers<[1], [0], [0], [1], [0, 0, 1, 1], [], []>} : vector<8x24xf32>, vector<24x24xf32>, vector<8x24xf32> -> vector<8x24xf32>
    %49 = vector.broadcast %42 : vector<1x24xf32> to vector<8x24xf32>
    %50 = arith.addf %48, %49 : vector<8x24xf32>
    %51 = vector.shape_cast %50 : vector<8x24xf32> to vector<8x1x24xf32>
    %52 = vector.shape_cast %47 : vector<8x24xf32> to vector<1x8x24xf32>
    %53 = vector.broadcast %51 : vector<8x1x24xf32> to vector<8x8x24xf32>
    %54 = vector.broadcast %52 : vector<1x8x24xf32> to vector<8x8x24xf32>
    %55 = arith.addf %53, %54 : vector<8x8x24xf32>
    %56 = arith.addf %55, %31 : vector<8x8x24xf32>
    %cst_29 = arith.constant 0.000000e+00 : f32
    %57 = vector.broadcast %cst_29 : f32 to vector<8x8x24xf32>
    %58 = arith.cmpf ogt, %56, %57 : vector<8x8x24xf32>
    %cst_30 = arith.constant 2.000000e-01 : f32
    %59 = vector.broadcast %cst_30 : f32 to vector<8x8x24xf32>
    %60 = arith.mulf %59, %56 : vector<8x8x24xf32>
    %61 = arith.select %58, %56, %60 : vector<8x8x24xi1>, vector<8x8x24xf32>
    %62 = vector.shape_cast %43 : vector<1x24xf32> to vector<1x1x24xf32>
    %63 = vector.broadcast %62 : vector<1x1x24xf32> to vector<8x8x24xf32>
    %64 = arith.mulf %61, %63 : vector<8x8x24xf32>
    %cst_31 = arith.constant dense<0.000000e+00> : vector<8x8xf32>
    %65 = vector.multi_reduction <add>, %64, %cst_31 [2] : vector<8x8x24xf32> to vector<8x8xf32>
    %66 = arith.addf %50, %47 : vector<8x24xf32>
    %67 = arith.addf %66, %38 : vector<8x24xf32>
    %cst_32 = arith.constant 0.000000e+00 : f32
    %68 = vector.broadcast %cst_32 : f32 to vector<8x24xf32>
    %69 = arith.cmpf ogt, %67, %68 : vector<8x24xf32>
    %cst_33 = arith.constant 2.000000e-01 : f32
    %70 = vector.broadcast %cst_33 : f32 to vector<8x24xf32>
    %71 = arith.mulf %70, %67 : vector<8x24xf32>
    %72 = arith.select %69, %67, %71 : vector<8x24xi1>, vector<8x24xf32>
    %73 = vector.broadcast %43 : vector<1x24xf32> to vector<8x24xf32>
    %74 = arith.mulf %72, %73 : vector<8x24xf32>
    %cst_34 = arith.constant dense<0.000000e+00> : vector<8xf32>
    %75 = vector.multi_reduction <add>, %74, %cst_34 [1] : vector<8x24xf32> to vector<8xf32>
    %76 = vector.shape_cast %75 : vector<8xf32> to vector<8x1xf32>
    %cst_35 = arith.constant 0.000000e+00 : f32
    %77 = vector.broadcast %cst_35 : f32 to vector<8x8xf32>
    %78 = arith.cmpf ogt, %8, %77 : vector<8x8xf32>
    %cst_36 = arith.constant -1.000000e+30 : f32
    %79 = vector.broadcast %cst_36 : f32 to vector<8x8xf32>
    %80 = arith.select %78, %65, %79 : vector<8x8xi1>, vector<8x8xf32>
    %81 = vector.shape_cast %76 : vector<8x1xf32> to vector<8x1xf32>
    %82 = vector.broadcast %81 : vector<8x1xf32> to vector<8x8xf32>
    %83 = arith.select %25, %82, %80 : vector<8x8xi1>, vector<8x8xf32>
    %cst_37 = arith.constant dense<0xFF800000> : vector<8xf32>
    %84 = vector.multi_reduction <maximumf>, %83, %cst_37 [1] : vector<8x8xf32> to vector<8xf32>
    %85 = vector.shape_cast %84 : vector<8xf32> to vector<8x1xf32>
    %86 = vector.broadcast %85 : vector<8x1xf32> to vector<8x8xf32>
    %87 = arith.subf %83, %86 : vector<8x8xf32>
    %88 = math.exp %87 : vector<8x8xf32>
    %cst_38 = arith.constant dense<0.000000e+00> : vector<8xf32>
    %89 = vector.multi_reduction <add>, %88, %cst_38 [1] : vector<8x8xf32> to vector<8xf32>
    %90 = vector.shape_cast %89 : vector<8xf32> to vector<8x1xf32>
    %91 = tpu.reciprocal %90 {approx = true} : vector<8x1xf32> -> vector<8x1xf32>
    %92 = vector.broadcast %91 : vector<8x1xf32> to vector<8x8xf32>
    %93 = arith.mulf %88, %92 : vector<8x8xf32>
    %cst_39 = arith.constant dense<0.000000e+00> : vector<8x24xf32>
    %94 = tpu.matmul %93, %47, %cst_39 {dimension_numbers = #tpu.dot_dimension_numbers<[1], [0], [0], [1], [0, 0, 1, 1], [], []>} : vector<8x8xf32>, vector<8x24xf32>, vector<8x24xf32> -> vector<8x24xf32>
    %95 = vector.broadcast %44 : vector<1x24xf32> to vector<8x24xf32>
    %96 = arith.addf %94, %95 : vector<8x24xf32>
    %cst_40 = arith.constant 0.000000e+00 : f32
    %97 = vector.broadcast %cst_40 : f32 to vector<8x24xf32>
    %98 = arith.maximumf %96, %97 : vector<8x24xf32>
    %c48 = arith.constant 48 : index
    %c0_41 = arith.constant 0 : index
    %99 = vector.load %arg5[%c48, %c0_41] : memref<272x128xf32, #tpu.memory_space<vmem>>, vector<4x36xf32>
    %c56 = arith.constant 56 : index
    %c0_42 = arith.constant 0 : index
    %100 = vector.load %arg5[%c56, %c0_42] : memref<272x128xf32, #tpu.memory_space<vmem>>, vector<1x36xf32>
    %cst_43 = arith.constant dense<0.000000e+00> : vector<64x36xf32>
    %101 = tpu.matmul %11, %99, %cst_43 {dimension_numbers = #tpu.dot_dimension_numbers<[1], [0], [0], [1], [0, 0, 1, 1], [], []>} : vector<64x4xf32>, vector<4x36xf32>, vector<64x36xf32> -> vector<64x36xf32>
    %102 = vector.broadcast %100 : vector<1x36xf32> to vector<64x36xf32>
    %103 = arith.addf %101, %102 : vector<64x36xf32>
    %104 = vector.shape_cast %103 : vector<64x36xf32> to vector<8x8x36xf32>
    %cst_44 = arith.constant dense<0.000000e+00> : vector<8x36xf32>
    %105 = tpu.matmul %12, %99, %cst_44 {dimension_numbers = #tpu.dot_dimension_numbers<[1], [0], [0], [1], [0, 0, 1, 1], [], []>} : vector<8x4xf32>, vector<4x36xf32>, vector<8x36xf32> -> vector<8x36xf32>
    %106 = vector.broadcast %22 : vector<8x1xf32> to vector<8x36xf32>
    %107 = arith.mulf %105, %106 : vector<8x36xf32>
    %108 = vector.broadcast %100 : vector<1x36xf32> to vector<8x36xf32>
    %109 = arith.addf %107, %108 : vector<8x36xf32>
    %110 = vector.broadcast %18 : vector<8x1xf32> to vector<8x36xf32>
    %111 = arith.mulf %109, %110 : vector<8x36xf32>
    %c144 = arith.constant 144 : index
    %c0_45 = arith.constant 0 : index
    %112 = vector.load %arg5[%c144, %c0_45] : memref<272x128xf32, #tpu.memory_space<vmem>>, vector<24x36xf32>
    %c168 = arith.constant 168 : index
    %c0_46 = arith.constant 0 : index
    %113 = vector.load %arg5[%c168, %c0_46] : memref<272x128xf32, #tpu.memory_space<vmem>>, vector<1x36xf32>
    %c176 = arith.constant 176 : index
    %c0_47 = arith.constant 0 : index
    %114 = vector.load %arg5[%c176, %c0_47] : memref<272x128xf32, #tpu.memory_space<vmem>>, vector<24x36xf32>
    %c200 = arith.constant 200 : index
    %c0_48 = arith.constant 0 : index
    %115 = vector.load %arg5[%c200, %c0_48] : memref<272x128xf32, #tpu.memory_space<vmem>>, vector<1x36xf32>
    %c208 = arith.constant 208 : index
    %c0_49 = arith.constant 0 : index
    %116 = vector.load %arg5[%c208, %c0_49] : memref<272x128xf32, #tpu.memory_space<vmem>>, vector<1x36xf32>
    %c216 = arith.constant 216 : index
    %c0_50 = arith.constant 0 : index
    %117 = vector.load %arg5[%c216, %c0_50] : memref<272x128xf32, #tpu.memory_space<vmem>>, vector<1x36xf32>
    %cst_51 = arith.constant dense<0.000000e+00> : vector<8x36xf32>
    %118 = tpu.matmul %98, %112, %cst_51 {dimension_numbers = #tpu.dot_dimension_numbers<[1], [0], [0], [1], [0, 0, 1, 1], [], []>} : vector<8x24xf32>, vector<24x36xf32>, vector<8x36xf32> -> vector<8x36xf32>
    %119 = vector.broadcast %113 : vector<1x36xf32> to vector<8x36xf32>
    %120 = arith.addf %118, %119 : vector<8x36xf32>
    %cst_52 = arith.constant dense<0.000000e+00> : vector<8x36xf32>
    %121 = tpu.matmul %98, %114, %cst_52 {dimension_numbers = #tpu.dot_dimension_numbers<[1], [0], [0], [1], [0, 0, 1, 1], [], []>} : vector<8x24xf32>, vector<24x36xf32>, vector<8x36xf32> -> vector<8x36xf32>
    %122 = vector.broadcast %115 : vector<1x36xf32> to vector<8x36xf32>
    %123 = arith.addf %121, %122 : vector<8x36xf32>
    %124 = vector.shape_cast %123 : vector<8x36xf32> to vector<8x1x36xf32>
    %125 = vector.shape_cast %120 : vector<8x36xf32> to vector<1x8x36xf32>
    %126 = vector.broadcast %124 : vector<8x1x36xf32> to vector<8x8x36xf32>
    %127 = vector.broadcast %125 : vector<1x8x36xf32> to vector<8x8x36xf32>
    %128 = arith.addf %126, %127 : vector<8x8x36xf32>
    %129 = arith.addf %128, %104 : vector<8x8x36xf32>
    %cst_53 = arith.constant 0.000000e+00 : f32
    %130 = vector.broadcast %cst_53 : f32 to vector<8x8x36xf32>
    %131 = arith.cmpf ogt, %129, %130 : vector<8x8x36xf32>
    %cst_54 = arith.constant 2.000000e-01 : f32
    %132 = vector.broadcast %cst_54 : f32 to vector<8x8x36xf32>
    %133 = arith.mulf %132, %129 : vector<8x8x36xf32>
    %134 = arith.select %131, %129, %133 : vector<8x8x36xi1>, vector<8x8x36xf32>
    %135 = vector.shape_cast %116 : vector<1x36xf32> to vector<1x1x36xf32>
    %136 = vector.broadcast %135 : vector<1x1x36xf32> to vector<8x8x36xf32>
    %137 = arith.mulf %134, %136 : vector<8x8x36xf32>
    %cst_55 = arith.constant dense<0.000000e+00> : vector<8x8xf32>
    %138 = vector.multi_reduction <add>, %137, %cst_55 [2] : vector<8x8x36xf32> to vector<8x8xf32>
    %139 = arith.addf %123, %120 : vector<8x36xf32>
    %140 = arith.addf %139, %111 : vector<8x36xf32>
    %cst_56 = arith.constant 0.000000e+00 : f32
    %141 = vector.broadcast %cst_56 : f32 to vector<8x36xf32>
    %142 = arith.cmpf ogt, %140, %141 : vector<8x36xf32>
    %cst_57 = arith.constant 2.000000e-01 : f32
    %143 = vector.broadcast %cst_57 : f32 to vector<8x36xf32>
    %144 = arith.mulf %143, %140 : vector<8x36xf32>
    %145 = arith.select %142, %140, %144 : vector<8x36xi1>, vector<8x36xf32>
    %146 = vector.broadcast %116 : vector<1x36xf32> to vector<8x36xf32>
    %147 = arith.mulf %145, %146 : vector<8x36xf32>
    %cst_58 = arith.constant dense<0.000000e+00> : vector<8xf32>
    %148 = vector.multi_reduction <add>, %147, %cst_58 [1] : vector<8x36xf32> to vector<8xf32>
    %149 = vector.shape_cast %148 : vector<8xf32> to vector<8x1xf32>
    %cst_59 = arith.constant 0.000000e+00 : f32
    %150 = vector.broadcast %cst_59 : f32 to vector<8x8xf32>
    %151 = arith.cmpf ogt, %8, %150 : vector<8x8xf32>
    %cst_60 = arith.constant -1.000000e+30 : f32
    %152 = vector.broadcast %cst_60 : f32 to vector<8x8xf32>
    %153 = arith.select %151, %138, %152 : vector<8x8xi1>, vector<8x8xf32>
    %154 = vector.shape_cast %149 : vector<8x1xf32> to vector<8x1xf32>
    %155 = vector.broadcast %154 : vector<8x1xf32> to vector<8x8xf32>
    %156 = arith.select %25, %155, %153 : vector<8x8xi1>, vector<8x8xf32>
    %cst_61 = arith.constant dense<0xFF800000> : vector<8xf32>
    %157 = vector.multi_reduction <maximumf>, %156, %cst_61 [1] : vector<8x8xf32> to vector<8xf32>
    %158 = vector.shape_cast %157 : vector<8xf32> to vector<8x1xf32>
    %159 = vector.broadcast %158 : vector<8x1xf32> to vector<8x8xf32>
    %160 = arith.subf %156, %159 : vector<8x8xf32>
    %161 = math.exp %160 : vector<8x8xf32>
    %cst_62 = arith.constant dense<0.000000e+00> : vector<8xf32>
    %162 = vector.multi_reduction <add>, %161, %cst_62 [1] : vector<8x8xf32> to vector<8xf32>
    %163 = vector.shape_cast %162 : vector<8xf32> to vector<8x1xf32>
    %164 = tpu.reciprocal %163 {approx = true} : vector<8x1xf32> -> vector<8x1xf32>
    %165 = vector.broadcast %164 : vector<8x1xf32> to vector<8x8xf32>
    %166 = arith.mulf %161, %165 : vector<8x8xf32>
    %cst_63 = arith.constant dense<0.000000e+00> : vector<8x36xf32>
    %167 = tpu.matmul %166, %120, %cst_63 {dimension_numbers = #tpu.dot_dimension_numbers<[1], [0], [0], [1], [0, 0, 1, 1], [], []>} : vector<8x8xf32>, vector<8x36xf32>, vector<8x36xf32> -> vector<8x36xf32>
    %168 = vector.broadcast %117 : vector<1x36xf32> to vector<8x36xf32>
    %169 = arith.addf %167, %168 : vector<8x36xf32>
    %cst_64 = arith.constant 0.000000e+00 : f32
    %170 = vector.broadcast %cst_64 : f32 to vector<8x36xf32>
    %171 = arith.maximumf %169, %170 : vector<8x36xf32>
    %c0_65 = arith.constant 0 : index
    %c0_66 = arith.constant 0 : index
    %c0_67 = arith.constant 0 : index
    %172 = vector.load %arg2[%c0_65, %c0_66, %c0_67] : memref<1x1x8xf32, #tpu.memory_space<vmem>>, vector<1x1x8xf32>
    %173 = vector.shape_cast %172 : vector<1x1x8xf32> to vector<1x8xf32>
    %cst_68 = arith.constant dense<0.000000e+00> : vector<1xf32>
    %174 = vector.multi_reduction <add>, %173, %cst_68 [1] : vector<1x8xf32> to vector<1xf32>
    %175 = vector.shape_cast %174 : vector<1xf32> to vector<1x1xf32>
    %cst_69 = arith.constant 1.000000e+00 : f32
    %176 = vector.broadcast %cst_69 : f32 to vector<1x1xf32>
    %177 = arith.maximumf %175, %176 : vector<1x1xf32>
    %cst_70 = arith.constant dense<0.000000e+00> : vector<1x36xf32>
    %178 = tpu.matmul %173, %171, %cst_70 {dimension_numbers = #tpu.dot_dimension_numbers<[1], [0], [0], [1], [0, 0, 1, 1], [], []>} : vector<1x8xf32>, vector<8x36xf32>, vector<1x36xf32> -> vector<1x36xf32>
    %179 = vector.broadcast %177 : vector<1x1xf32> to vector<1x36xf32>
    %180 = arith.divf %178, %179 : vector<1x36xf32>
    %c224 = arith.constant 224 : index
    %c0_71 = arith.constant 0 : index
    %181 = vector.load %arg5[%c224, %c0_71] : memref<272x128xf32, #tpu.memory_space<vmem>>, vector<36x64xf32>
    %cst_72 = arith.constant dense<0.000000e+00> : vector<1x64xf32>
    %182 = tpu.matmul %180, %181, %cst_72 {dimension_numbers = #tpu.dot_dimension_numbers<[1], [0], [0], [1], [0, 0, 1, 1], [], []>} : vector<1x36xf32>, vector<36x64xf32>, vector<1x64xf32> -> vector<1x64xf32>
    %c264 = arith.constant 264 : index
    %c0_73 = arith.constant 0 : index
    %183 = vector.load %arg5[%c264, %c0_73] : memref<272x128xf32, #tpu.memory_space<vmem>>, vector<1x64xf32>
    %184 = arith.addf %182, %183 : vector<1x64xf32>
    %c0_74 = arith.constant 0 : index
    %c0_75 = arith.constant 0 : index
    %c0_76 = arith.constant 0 : index
    %185 = vector.load %arg6[%c0_74, %c0_75, %c0_76] : memref<1x1x64xf32, #tpu.memory_space<vmem>>, vector<1x1x64xf32>
    %186 = vector.shape_cast %185 : vector<1x1x64xf32> to vector<1x64xf32>
    %187 = vector.shape_cast %184 : vector<1x64xf32> to vector<1x1x64xf32>
    tpu.vector_store %arg6[%c0_74, %c0_75, %c0_76], %187 {strides = array<i32>} : memref<1x1x64xf32, #tpu.memory_space<vmem>>, vector<1x1x64xf32>,
    return
  }
  func.func @transform_0(%arg0: i32) -> (i32, i32, i32) {
    %c0_i32 = arith.constant 0 : i32
    %c0_i32_0 = arith.constant 0 : i32
    %c0_i32_1 = arith.constant 0 : i32
    return %arg0, %c0_i32, %c0_i32_0 : i32, i32, i32
  }
  func.func @transform_1(%arg0: i32) -> (i32, i32, i32) {
    %c0_i32 = arith.constant 0 : i32
    %c0_i32_0 = arith.constant 0 : i32
    %c0_i32_1 = arith.constant 0 : i32
    return %arg0, %c0_i32, %c0_i32_0 : i32, i32, i32
  }
  func.func @transform_2(%arg0: i32) -> (i32, i32, i32, i32) {
    %c0_i32 = arith.constant 0 : i32
    %c0_i32_0 = arith.constant 0 : i32
    %c0_i32_1 = arith.constant 0 : i32
    %c0_i32_2 = arith.constant 0 : i32
    return %arg0, %c0_i32, %c0_i32_0, %c0_i32_1 : i32, i32, i32, i32
  }
  func.func @transform_3(%arg0: i32) -> (i32, i32, i32) {
    %c0_i32 = arith.constant 0 : i32
    %c0_i32_0 = arith.constant 0 : i32
    %c0_i32_1 = arith.constant 0 : i32
    return %arg0, %c0_i32, %c0_i32_0 : i32, i32, i32
  }
  func.func @transform_4(%arg0: i32) -> (i32, i32) {
    %c0_i32 = arith.constant 0 : i32
    %c0_i32_0 = arith.constant 0 : i32
    %c0_i32_1 = arith.constant 0 : i32
    return %c0_i32, %c0_i32_0 : i32, i32
  }
  func.func @transform_5(%arg0: i32) -> (i32, i32, i32) {
    %c0_i32 = arith.constant 0 : i32
    %c0_i32_0 = arith.constant 0 : i32
    %c0_i32_1 = arith.constant 0 : i32
    return %arg0, %c0_i32, %c0_i32_0 : i32, i32, i32
  }
}

</mosaic_0001>

<llo_original>
// kernel: custom-call.8
$region0: #{custom-call.8}
  %s0 = inlined_call_operand.vmem [shape: u32[2], index: 0, kind: output, shape index: {}]

// kernel: graph_encoder_forward.1
$region0: #{graph_encoder_forward.1}
  #allocation0 [shape = 'u32[]', space=smem, size = 0x4, offset = 0x4, fixed_abs, tag = 'smem constant byte address 0x4 - core index']
  #allocation1 [shape = 'u32[144,128]{1,0:T(1,128)}', space=vmem, size = 0x12000, scoped, tag = 'internal scratch']
  %s0 = inlined_call_operand.vmem [shape: f32[2,8,17], index: 0, kind: input, shape index: {}]
  %s1 = inlined_call_operand.vmem [shape: f32[2,1,8], index: 1, kind: input, shape index: {}]
  %s2 = inlined_call_operand.vmem [shape: f32[2,8,8,4], index: 2, kind: input, shape index: {}]
  %s3 = inlined_call_operand.vmem [shape: f32[2,8,8], index: 3, kind: input, shape index: {}]
  %s4 = inlined_call_operand.vmem [shape: f32[272,128], index: 4, kind: input, shape index: {}]
  %s5 = inlined_call_operand.hbm [shape: f32[2,1,64], index: 5, kind: output, shape index: {}]
  %s6 = sld [smem:[#allocation0]]
  $region53: #{graph_encoder_forward.1} parent=0
    _
  %s8 = ssub.s32 1, %s6
  %s9 = scalar_select 0, %s8, %s6
  $region1: #{graph_encoder_forward.1} parent=0
    #allocation2 [shape = 'u8[1024]{0}', space=vmem, size = 0x400, scoped, tag = 'output window, operand 0']
    #allocation3 [shape = 's32[2]{0}', space=sflag, size = 0x8, scoped, tag = 'scoped memory for graph_encoder_forward.1']
    %10 = vsyncpa [#allocation3], 0
    %s11 = scalar_lea.sflag [#allocation3], 1
    %12 = vsyncpa %s11, 0
    loop: start=0, step=1, limit=4
    $region2: #{graph_encoder_forward.1} parent=1 // loop_pre_header
      _
    $region3: #{graph_encoder_forward.1} parent=1 // loop_header
      %s14 = sphi 0, %s18
      %p15 = scmp.ge.s32.totalorder %s14, 4
      %s24 = sphi 0, %s26
      %s27 = sphi 0, %s24
      %s28 = sphi 0, %s27
      %s44 = sphi 0, %s28
      %s50 = sphi 0, %s52
      %s53 = sphi 0, %s50
      %s54 = sphi 0, %s53
      %s70 = sphi 0, %s54
      %s76 = sphi 0, %s78
      %s79 = sphi 0, %s76
      %s80 = sphi 0, %s79
      %s96 = sphi 0, %s80
      %s102 = sphi 0, %s104
      %s105 = sphi 0, %s102
      %s106 = sphi 0, %s105
      %s122 = sphi 0, %s106
      %s126 = sphi 0, %s126
      %s128 = sphi 0, %s126
      %s129 = sphi 0, %s128
      %s143 = sphi 0, %s129
      %s149 = sphi 0, %s151
      %s152 = sphi 0, %s149
      %s153 = sphi 0, %s152
      %s169 = sphi 0, %s153
    $region4: #{graph_encoder_forward.1} parent=1 // loop_header_branch
      %17 = sbr.rel (%p15) target = $region8
    $region5: #{graph_encoder_forward.1} parent=1 // loop_body
      %s19 = ssub.s32 %s14, 1
      %s20 = ssub.s32 %s14, 2
      %s21 = sadd.s32 %s14, 1
      %s22 = ssub.s32 %s14, %s21
      %p23 = scmp.eq.s32.totalorder %s22, 0
      %s25 = sadd.s32 %s24, 1
      %s26 = scalar_select %p23, %s24, %s25
      %p29 = pneg %p23
      %p30 = scmp.eq.s32.totalorder %s14, 1
      %p31 = por %p29, %p30
      %p32 = scmp.ne.s32.totalorder %s24, %s27
      %p33 = scmp.eq.s32.totalorder %s14, 0
      %p34 = por %p32, %p33
      %p35 = scmp.ne.s32.totalorder %s24, %s27
      %p36 = scmp.eq.s32.totalorder %s19, 1
      %p37 = por %p35, %p36
      %p38 = scmp.ne.s32.totalorder %s27, %s28
      %p39 = scmp.eq.s32.totalorder %s19, 0
      %p40 = por %p38, %p39
      %p41 = scmp.ne.s32.totalorder %s27, %s28
      %p42 = scmp.eq.s32.totalorder %s20, 1
      %p43 = por %p41, %p42
      %p45 = scmp.ne.s32.totalorder %s28, %s44
      %p46 = scmp.eq.s32.totalorder %s20, 0
      %p47 = por %p45, %p46
      %s48 = ssub.s32 %s14, %s21
      %p49 = scmp.eq.s32.totalorder %s48, 0
      %s51 = sadd.s32 %s50, 1
      %s52 = scalar_select %p49, %s50, %s51
      %p55 = pneg %p49
      %p56 = scmp.eq.s32.totalorder %s14, 1
      %p57 = por %p55, %p56
      %p58 = scmp.ne.s32.totalorder %s50, %s53
      %p59 = scmp.eq.s32.totalorder %s14, 0
      %p60 = por %p58, %p59
      %p61 = scmp.ne.s32.totalorder %s50, %s53
      %p62 = scmp.eq.s32.totalorder %s19, 1
      %p63 = por %p61, %p62
      %p64 = scmp.ne.s32.totalorder %s53, %s54
      %p65 = scmp.eq.s32.totalorder %s19, 0
      %p66 = por %p64, %p65
      %p67 = scmp.ne.s32.totalorder %s53, %s54
      %p68 = scmp.eq.s32.totalorder %s20, 1
      %p69 = por %p67, %p68
      %p71 = scmp.ne.s32.totalorder %s54, %s70
      %p72 = scmp.eq.s32.totalorder %s20, 0
      %p73 = por %p71, %p72
      %s74 = ssub.s32 %s14, %s21
      %p75 = scmp.eq.s32.totalorder %s74, 0
      %s77 = sadd.s32 %s76, 1
      %s78 = scalar_select %p75, %s76, %s77
      %p81 = pneg %p75
      %p82 = scmp.eq.s32.totalorder %s14, 1
      %p83 = por %p81, %p82
      %p84 = scmp.ne.s32.totalorder %s76, %s79
      %p85 = scmp.eq.s32.totalorder %s14, 0
      %p86 = por %p84, %p85
      %p87 = scmp.ne.s32.totalorder %s76, %s79
      %p88 = scmp.eq.s32.totalorder %s19, 1
      %p89 = por %p87, %p88
      %p90 = scmp.ne.s32.totalorder %s79, %s80
      %p91 = scmp.eq.s32.totalorder %s19, 0
      %p92 = por %p90, %p91
      %p93 = scmp.ne.s32.totalorder %s79, %s80
      %p94 = scmp.eq.s32.totalorder %s20, 1
      %p95 = por %p93, %p94
      %p97 = scmp.ne.s32.totalorder %s80, %s96
      %p98 = scmp.eq.s32.totalorder %s20, 0
      %p99 = por %p97, %p98
      %s100 = ssub.s32 %s14, %s21
      %p101 = scmp.eq.s32.totalorder %s100, 0
      %s103 = sadd.s32 %s102, 1
      %s104 = scalar_select %p101, %s102, %s103
      %p107 = pneg %p101
      %p108 = scmp.eq.s32.totalorder %s14, 1
      %p109 = por %p107, %p108
      %p110 = scmp.ne.s32.totalorder %s102, %s105
      %p111 = scmp.eq.s32.totalorder %s14, 0
      %p112 = por %p110, %p111
      %p113 = scmp.ne.s32.totalorder %s102, %s105
      %p114 = scmp.eq.s32.totalorder %s19, 1
      %p115 = por %p113, %p114
      %p116 = scmp.ne.s32.totalorder %s105, %s106
      %p117 = scmp.eq.s32.totalorder %s19, 0
      %p118 = por %p116, %p117
      %p119 = scmp.ne.s32.totalorder %s105, %s106
      %p120 = scmp.eq.s32.totalorder %s20, 1
      %p121 = por %p119, %p120
      %p123 = scmp.ne.s32.totalorder %s106, %s122
      %p124 = scmp.eq.s32.totalorder %s20, 0
      %p125 = por %p123, %p124
      %s127 = sadd.s32 %s126, 1
      %p130 = scmp.eq.s32.totalorder %s14, 1
      %p131 = scmp.ne.s32.totalorder %s126, %s128
      %p132 = scmp.eq.s32.totalorder %s14, 0
      %p133 = por %p131, %p132
      %p134 = scmp.ne.s32.totalorder %s126, %s128
      %p135 = scmp.eq.s32.totalorder %s19, 1
      %p136 = por %p134, %p135
      %p137 = scmp.ne.s32.totalorder %s128, %s129
      %p138 = scmp.eq.s32.totalorder %s19, 0
      %p139 = por %p137, %p138
      %p140 = scmp.ne.s32.totalorder %s128, %s129
      %p141 = scmp.eq.s32.totalorder %s20, 1
      %p142 = por %p140, %p141
      %p144 = scmp.ne.s32.totalorder %s129, %s143
      %p145 = scmp.eq.s32.totalorder %s20, 0
      %p146 = por %p144, %p145
      %s147 = ssub.s32 %s14, %s21
      %p148 = scmp.eq.s32.totalorder %s147, 0
      %s150 = sadd.s32 %s149, 1
      %s151 = scalar_select %p148, %s149, %s150
      %p154 = pneg %p148
      %p155 = scmp.eq.s32.totalorder %s14, 1
      %p156 = por %p154, %p155
      %p157 = scmp.ne.s32.totalorder %s149, %s152
      %p158 = scmp.eq.s32.totalorder %s14, 0
      %p159 = por %p157, %p158
      %p160 = scmp.ne.s32.totalorder %s149, %s152
      %p161 = scmp.eq.s32.totalorder %s19, 1
      %p162 = por %p160, %p161
      %p163 = scmp.ne.s32.totalorder %s152, %s153
      %p164 = scmp.eq.s32.totalorder %s19, 0
      %p165 = por %p163, %p164
      %p166 = scmp.ne.s32.totalorder %s152, %s153
      %p167 = scmp.eq.s32.totalorder %s20, 1
      %p168 = por %p166, %p167
      %p170 = scmp.ne.s32.totalorder %s153, %s169
      %p171 = scmp.eq.s32.totalorder %s20, 0
      %p172 = por %p170, %p171
      %p173 = scmp.le.s32.totalorder 1, %s14
      %p174 = scmp.lt.s32.totalorder %s14, 3
      %p175 = pnand %p173, %p174
      %p176 = pneg %p175
      // Predicated region
      $region9: #{graph_encoder_forward.1} parent=5 // pred_check
        _
      $region10: #{graph_encoder_forward.1} parent=5 // pred_check_branch
        %178 = sbr.rel (%p175) target = $region12
      $region11: #{graph_encoder_forward.1} parent=5 // pred_region
        %s179 = ssub.s32 %s14, 1
        // Predicated region
        $region13: #{graph_encoder_forward.1} parent=11 // pred_check
          %p180 = pneg %p139
        $region14: #{graph_encoder_forward.1} parent=11 // pred_check_branch
          %182 = sbr.rel (%p180) target = $region16
        $region15: #{graph_encoder_forward.1} parent=11 // pred_region
          _
        $region16: #{graph_encoder_forward.1} parent=11 // pred_fallthru
          _
      $region12: #{graph_encoder_forward.1} parent=5 // pred_fallthru
        _
      %p183 = scmp.lt.s32.totalorder %s14, 2
      // Predicated region
      $region17: #{graph_encoder_forward.1} parent=5 // pred_check
        %p184 = pneg %p183
      $region18: #{graph_encoder_forward.1} parent=5 // pred_check_branch
        %186 = sbr.rel (%p184) target = $region20
      $region19: #{graph_encoder_forward.1} parent=5 // pred_region
        // Predicated region
        $region21: #{graph_encoder_forward.1} parent=19 // pred_check
          %p187 = pneg %p34
        $region22: #{graph_encoder_forward.1} parent=19 // pred_check_branch
          %189 = sbr.rel (%p187) target = $region24
        $region23: #{graph_encoder_forward.1} parent=19 // pred_region
          %p190 = scmp.lt.s32.totalorder %s14, 1
          %s191 = scalar_select %p190, %s14, 1
          %s192 = smul.addr %s191, 8
          %s193 = scalar_lea.vmem %s0, %s192
        $region24: #{graph_encoder_forward.1} parent=19 // pred_fallthru
          _
        // Predicated region
        $region25: #{graph_encoder_forward.1} parent=19 // pred_check
          %p194 = pneg %p60
        $region26: #{graph_encoder_forward.1} parent=19 // pred_check_branch
          %196 = sbr.rel (%p194) target = $region28
        $region27: #{graph_encoder_forward.1} parent=19 // pred_region
          %p197 = scmp.lt.s32.totalorder %s14, 1
          %s198 = scalar_select %p197, %s14, 1
          %s199 = scalar_lea.vmem %s1, %s198
        $region28: #{graph_encoder_forward.1} parent=19 // pred_fallthru
          _
        // Predicated region
        $region29: #{graph_encoder_forward.1} parent=19 // pred_check
          %p200 = pneg %p86
        $region30: #{graph_encoder_forward.1} parent=19 // pred_check_branch
          %202 = sbr.rel (%p200) target = $region32
        $region31: #{graph_encoder_forward.1} parent=19 // pred_region
          %p203 = scmp.lt.s32.totalorder %s14, 1
          %s204 = scalar_select %p203, %s14, 1
          %s205 = smul.addr %s204, 8
          %s206 = smul.addr %s205, 8
          %s207 = scalar_lea.vmem %s2, %s206
        $region32: #{graph_encoder_forward.1} parent=19 // pred_fallthru
          _
        // Predicated region
        $region33: #{graph_encoder_forward.1} parent=19 // pred_check
          %p208 = pneg %p112
        $region34: #{graph_encoder_forward.1} parent=19 // pred_check_branch
          %210 = sbr.rel (%p208) target = $region36
        $region35: #{graph_encoder_forward.1} parent=19 // pred_region
          %p211 = scmp.lt.s32.totalorder %s14, 1
          %s212 = scalar_select %p211, %s14, 1
          %s213 = smul.addr %s212, 8
          %s214 = scalar_lea.vmem %s3, %s213
        $region36: #{graph_encoder_forward.1} parent=19 // pred_fallthru
          _
      $region20: #{graph_encoder_forward.1} parent=5 // pred_fallthru
        _
      %p215 = scmp.le.s32.totalorder 1, %s14
      %p216 = scmp.lt.s32.totalorder %s14, 3
      %p217 = pnand %p215, %p216
      %p218 = pneg %p217
      // Predicated region
      $region37: #{graph_encoder_forward.1} parent=5 // pred_check
        _
      $region38: #{graph_encoder_forward.1} parent=5 // pred_check_branch
        %220 = sbr.rel (%p217) target = $region40
      $region39: #{graph_encoder_forward.1} parent=5 // pred_region
        %s221 = ssub.s32 %s14, 1
        %p222 = scmp.lt.s32.totalorder %s19, 1
        %s223 = scalar_select %p222, %s19, 1
        %s224 = smul.addr %s223, 8
        %s225 = scalar_lea.vmem %s0, %s224
        %p226 = pneg %p40
        %p227 = pneg %p37
        %p228 = scmp.lt.s32.totalorder %s19, 1
        %s229 = scalar_select %p228, %s19, 1
        %s230 = scalar_lea.vmem %s1, %s229
        %p231 = pneg %p66
        %p232 = pneg %p63
        %p233 = scmp.lt.s32.totalorder %s19, 1
        %s234 = scalar_select %p233, %s19, 1
        %s235 = smul.addr %s234, 8
        %s236 = smul.addr %s235, 8
        %s237 = scalar_lea.vmem %s2, %s236
        %p238 = pneg %p92
        %p239 = pneg %p89
        %p240 = scmp.lt.s32.totalorder %s19, 1
        %s241 = scalar_select %p240, %s19, 1
        %s242 = smul.addr %s241, 8
        %s243 = scalar_lea.vmem %s3, %s242
        %p244 = pneg %p118
        %p245 = pneg %p115
        %p246 = pneg %p139
        %p247 = pneg %p136
        %p248 = pneg %p165
        %p249 = pneg %p162
        %s250 = sand.u32 %s152, 1
        %s251 = scalar_lea.sflag [#allocation3], %s250
        %s252 = sand.u32 %s152, 1
        %s253 = scalar_lea.vmem [#allocation2], %s252
        %p254 = scmp.lt.s32.totalorder %s19, 1
        %s255 = scalar_select %p254, %s19, 1
        %s256 = smul.addr %s255, 8
        %s257 = scalar_lea.vmem %s0, %s256
        %p258 = scmp.lt.s32.totalorder %s19, 1
        %s259 = scalar_select %p258, %s19, 1
        %s260 = scalar_lea.vmem %s1, %s259
        %p261 = scmp.lt.s32.totalorder %s19, 1
        %s262 = scalar_select %p261, %s19, 1
        %s263 = smul.addr %s262, 8
        %s264 = smul.addr %s263, 8
        %s265 = scalar_lea.vmem %s2, %s264
        %p266 = scmp.lt.s32.totalorder %s19, 1
        %s267 = scalar_select %p266, %s19, 1
        %s268 = smul.addr %s267, 8
        %s269 = scalar_lea.vmem %s3, %s268
        %v270 = vld [vmem:[%s257] sm:$0xff]
        %v271 = vld [vmem:[%s4] sm:$0xff]
        %v272 = vld [vmem:[%s4 + $0x8] sm:$0xff]
        %v273 = vld [vmem:[%s4 + $0x10] sm:$0x1]
        %v274 = vld [vmem:[%s4 + $0x18] sm:$0x1]
        %v275 = vlaneseq
        %v276 = vshrl.u32 %v275, 7
        %v277 = vsub.s32 0, %v276
        %v278 = vrot.slane %v274, %v277
        %vm279 = vcmask 138240
        %v281 = vsel %vm279, %v270, 0
        %vm283 = vcmask 1040384
        %v285 = vsel %vm283, %v273, 0
        %287 = vmatprep.subr.mxu0 0.0
        %288 = vmatpush1.msra.mxu0 %v271
        %289 = vmatprep.subr.mxu0 0.0
        %290 = vmatpush1.msra.mxu0 %v272
        %291 = vmatprep.subr.mxu0 0.0
        %292 = vmatpush1.msra.mxu0 %v285
        %293 = vmatprep.subr.mxu0 0.0
        %294 = vmatpush1.msra.mxu0 0.0
        %295 = vmatprep.subr.mxu0 0.0
        %296 = vmatpush1.msra.mxu0 0.0
        %297 = vmatprep.subr.mxu0 0.0
        %298 = vmatpush1.msra.mxu0 0.0
        %299 = vmatprep.subr.mxu0 0.0
        %300 = vmatpush1.msra.mxu0 0.0
        %301 = vmatprep.subr.mxu0 0.0
        %302 = vmatpush1.msra.mxu0 0.0
        %303 = vmatprep.subr.mxu0 0.0
        %304 = vmatpush1.msra.mxu0 0.0
        %305 = vmatprep.subr.mxu0 0.0
        %306 = vmatpush1.msra.mxu0 0.0
        %307 = vmatprep.subr.mxu0 0.0
        %308 = vmatpush1.msra.mxu0 0.0
        %309 = vmatprep.subr.mxu0 0.0
        %310 = vmatpush1.msra.mxu0 0.0
        %311 = vmatprep.subr.mxu0 0.0
        %312 = vmatpush1.msra.mxu0 0.0
        %313 = vmatprep.subr.mxu0 0.0
        %314 = vmatpush1.msra.mxu0 0.0
        %315 = vmatprep.subr.mxu0 0.0
        %316 = vmatpush1.msra.mxu0 0.0
        %317 = vmatprep.subr.mxu0 0.0
        %318 = vmatpush1.msra.mxu0 0.0
        %319 = vmatprep.subr.mxu0 0.0
        %320 = vmatpush1.msra.mxu0 0.0
        %321 = vmatprep.subr.mxu0 0.0
        %322 = vmatpush1.msra.mxu0 0.0
        %323 = vmatprep.subr.mxu0 0.0
        %324 = vmatpush1.msra.mxu0 0.0
        %325 = vmatprep.subr.mxu0 0.0
        %326 = vmatpush1.msra.mxu0 0.0
        %327 = vmatprep.subr.mxu0 0.0
        %328 = vmatpush1.msra.mxu0 0.0
        %329 = vmatprep.subr.mxu0 0.0
        %330 = vmatpush1.msra.mxu0 0.0
        %331 = vmatprep.subr.mxu0 0.0
        %332 = vmatpush1.msra.mxu0 0.0
        %333 = vmatprep.subr.mxu0 0.0
        %334 = vmatpush1.msra.mxu0 0.0
        %335 = vmatprep.subr.mxu0 0.0
        %336 = vmatpush1.msra.mxu0 0.0
        %337 = vmatprep.subr.mxu0 0.0
        %338 = vmatpush1.msra.mxu0 0.0
        %339 = vmatprep.subr.mxu0 0.0
        %340 = vmatpush1.msra.mxu0 0.0
        %341 = vmatprep.subr.mxu0 0.0
        %342 = vmatpush1.msra.mxu0 0.0
        %343 = vmatprep.subr.mxu0 0.0
        %344 = vmatpush1.msra.mxu0 0.0
        %345 = vmatprep.subr.mxu0 0.0
        %346 = vmatpush1.msra.mxu0 0.0
        %347 = vmatprep.subr.mxu0 0.0
        %348 = vmatpush1.msra.mxu0 0.0
        %349 = vmatprep.subr.mxu0 0.0
        %350 = vmatpush1.msra.mxu0 0.0
        %351 = vmatprep.mubr.f32.mxu0 0.0
        %352 = vmatmul.mubr.f32.gmra.mrb[0].mxu0 %v281
        %v353 = vpop.f32.mrb[0].mxu0
        %v354 = vadd.f32 %v278, %v353
        %v355 = vpop.f32.mrb[0].mxu0
        %356 = vdwg.mxu0
        %v357 = vld [vmem:[%s269] sm:$0xff]
        %v358 = vld [vmem:[%s265] sm:$0xff]
        %v359 = vld [vmem:[%s265 + $0x8] sm:$0xff]
        %v360 = vld [vmem:[%s265 + $0x10] sm:$0xff]
        %v361 = vld [vmem:[%s265 + $0x18] sm:$0xff]
        %v362 = vld [vmem:[%s265 + $0x20] sm:$0xff]
        %v363 = vld [vmem:[%s265 + $0x28] sm:$0xff]
        %v364 = vld [vmem:[%s265 + $0x30] sm:$0xff]
        %v365 = vld [vmem:[%s265 + $0x38] sm:$0xff]
        %vm366 = vcmask 31744
        %v367 = vsel %vm366, %v358, 0.0
        %v368 = vrot.slane %v367, 4
        %v369 = vadd.f32 %v367, %v368
        %v370 = vrot.slane %v369, 2
        %v371 = vadd.f32 %v369, %v370
        %v372 = vrot.slane %v371, 1
        %v373 = vadd.f32 %v371, %v372
        %v374 = vsel %vm366, %v359, 0.0
        %v375 = vrot.slane %v374, 4
        %v376 = vadd.f32 %v374, %v375
        %v377 = vrot.slane %v376, 2
        %v378 = vadd.f32 %v376, %v377
        %v379 = vrot.slane %v378, 1
        %v380 = vadd.f32 %v378, %v379
        %v381 = vsel %vm366, %v360, 0.0
        %v382 = vrot.slane %v381, 4
        %v383 = vadd.f32 %v381, %v382
        %v384 = vrot.slane %v383, 2
        %v385 = vadd.f32 %v383, %v384
        %v386 = vrot.slane %v385, 1
        %v387 = vadd.f32 %v385, %v386
        %v388 = vsel %vm366, %v361, 0.0
        %v389 = vrot.slane %v388, 4
        %v390 = vadd.f32 %v388, %v389
        %v391 = vrot.slane %v390, 2
        %v392 = vadd.f32 %v390, %v391
        %v393 = vrot.slane %v392, 1
        %v394 = vadd.f32 %v392, %v393
        %v395 = vsel %vm366, %v362, 0.0
        %v396 = vrot.slane %v395, 4
        %v397 = vadd.f32 %v395, %v396
        %v398 = vrot.slane %v397, 2
        %v399 = vadd.f32 %v397, %v398
        %v400 = vrot.slane %v399, 1
        %v401 = vadd.f32 %v399, %v400
        %v402 = vsel %vm366, %v363, 0.0
        %v403 = vrot.slane %v402, 4
        %v404 = vadd.f32 %v402, %v403
        %v405 = vrot.slane %v404, 2
        %v406 = vadd.f32 %v404, %v405
        %v407 = vrot.slane %v406, 1
        %v408 = vadd.f32 %v406, %v407
        %v409 = vsel %vm366, %v364, 0.0
        %v410 = vrot.slane %v409, 4
        %v411 = vadd.f32 %v409, %v410
        %v412 = vrot.slane %v411, 2
        %v413 = vadd.f32 %v411, %v412
        %v414 = vrot.slane %v413, 1
        %v415 = vadd.f32 %v413, %v414
        %v416 = vsel %vm366, %v365, 0.0
        %v417 = vrot.slane %v416, 4
        %v418 = vadd.f32 %v416, %v417
        %v419 = vrot.slane %v418, 2
        %v420 = vadd.f32 %v418, %v419
        %v421 = vrot.slane %v420, 1
        %v422 = vadd.f32 %v420, %v421
        %vm423 = vcmask 64512
        %v424 = vsel %vm423, %v357, 0.0
        %425 = vadd.xlane.f32.xlu0 %v424
        %v426 = vpop.xlane.xlu0 %425
        %vm427 = vcmp.gt.f32.partialorder %v426, 0.0
        %v428 = vsel %vm427, 1, 0
        %v429 = vcvt.s32.f32 %v428
        %v430 = vmax.f32 %v426, 1.0
        %v431 = vrcp.pop %v430
        %v432 = vmul.f32 1.0, %v431
        %v433 = vlaneseq
        %v434 = vshrl.u32 %v433, 7
        %v435 = vlaneseq
        %v436 = vand.u32 %v435, 127
        %vm437 = vcmp.eq.s32.totalorder %v434, %v436
        %v438 = vld [vmem:[%s4 + $0x20] sm:$0xf]
        %v439 = vld [vmem:[%s4 + $0x28] sm:$0x1]
        %v440 = vlaneseq
        %v441 = vshrl.u32 %v440, 7
        %v442 = vsub.s32 0, %v441
        %v443 = vrot.slane %v439, %v442
        %v445 = vsel %vm366, %v358, 0
        %v448 = vsel %vm366, %v359, 0
        %v451 = vsel %vm366, %v360, 0
        %v454 = vsel %vm366, %v361, 0
        %v457 = vsel %vm366, %v362, 0
        %v460 = vsel %vm366, %v363, 0
        %v463 = vsel %vm366, %v364, 0
        %v466 = vsel %vm366, %v365, 0
        %vm468 = vcmask 1043456
        %v470 = vsel %vm468, %v438, 0
        %472 = vmatprep.subr.mxu0 0.0
        %473 = vmatpush1.msra.mxu0 %v470
        %474 = vmatprep.subr.mxu0 0.0
        %475 = vmatpush1.msra.mxu0 0.0
        %476 = vmatprep.subr.mxu0 0.0
        %477 = vmatpush1.msra.mxu0 0.0
        %478 = vmatprep.subr.mxu0 0.0
        %479 = vmatpush1.msra.mxu0 0.0
        %480 = vmatprep.subr.mxu0 0.0
        %481 = vmatpush1.msra.mxu0 0.0
        %482 = vmatprep.subr.mxu0 0.0
        %483 = vmatpush1.msra.mxu0 0.0
        %484 = vmatprep.subr.mxu0 0.0
        %485 = vmatpush1.msra.mxu0 0.0
        %486 = vmatprep.subr.mxu0 0.0
        %487 = vmatpush1.msra.mxu0 0.0
        %488 = vmatprep.subr.mxu0 0.0
        %489 = vmatpush1.msra.mxu0 0.0
        %490 = vmatprep.subr.mxu0 0.0
        %491 = vmatpush1.msra.mxu0 0.0
        %492 = vmatprep.subr.mxu0 0.0
        %493 = vmatpush1.msra.mxu0 0.0
        %494 = vmatprep.subr.mxu0 0.0
        %495 = vmatpush1.msra.mxu0 0.0
        %496 = vmatprep.subr.mxu0 0.0
        %497 = vmatpush1.msra.mxu0 0.0
        %498 = vmatprep.subr.mxu0 0.0
        %499 = vmatpush1.msra.mxu0 0.0
        %500 = vmatprep.subr.mxu0 0.0
        %501 = vmatpush1.msra.mxu0 0.0
        %502 = vmatprep.subr.mxu0 0.0
        %503 = vmatpush1.msra.mxu0 0.0
        %504 = vmatprep.subr.mxu0 0.0
        %505 = vmatpush1.msra.mxu0 0.0
        %506 = vmatprep.subr.mxu0 0.0
        %507 = vmatpush1.msra.mxu0 0.0
        %508 = vmatprep.subr.mxu0 0.0
        %509 = vmatpush1.msra.mxu0 0.0
        %510 = vmatprep.subr.mxu0 0.0
        %511 = vmatpush1.msra.mxu0 0.0
        %512 = vmatprep.subr.mxu0 0.0
        %513 = vmatpush1.msra.mxu0 0.0
        %514 = vmatprep.subr.mxu0 0.0
        %515 = vmatpush1.msra.mxu0 0.0
        %516 = vmatprep.subr.mxu0 0.0
        %517 = vmatpush1.msra.mxu0 0.0
        %518 = vmatprep.subr.mxu0 0.0
        %519 = vmatpush1.msra.mxu0 0.0
        %520 = vmatprep.subr.mxu0 0.0
        %521 = vmatpush1.msra.mxu0 0.0
        %522 = vmatprep.subr.mxu0 0.0
        %523 = vmatpush1.msra.mxu0 0.0
        %524 = vmatprep.subr.mxu0 0.0
        %525 = vmatpush1.msra.mxu0 0.0
        %526 = vmatprep.subr.mxu0 0.0
        %527 = vmatpush1.msra.mxu0 0.0
        %528 = vmatprep.subr.mxu0 0.0
        %529 = vmatpush1.msra.mxu0 0.0
        %530 = vmatprep.subr.mxu0 0.0
        %531 = vmatpush1.msra.mxu0 0.0
        %532 = vmatprep.subr.mxu0 0.0
        %533 = vmatpush1.msra.mxu0 0.0
        %534 = vmatprep.subr.mxu0 0.0
        %535 = vmatpush1.msra.mxu0 0.0
        %536 = vmatprep.mubr.f32.mxu0 0.0
        %537 = vmatmul.mubr.f32.gmra.mrb[0].mxu0 %v445
        %v538 = vpop.f32.mrb[0].mxu0
        %v539 = vadd.f32 %v443, %v538
        %v540 = vpop.f32.mrb[0].mxu0
        %541 = vmatprep.mubr.f32.mxu0 0.0
        %542 = vmatmul.mubr.f32.gmra.mrb[0].mxu0 %v448
        %v543 = vpop.f32.mrb[0].mxu0
        %v544 = vadd.f32 %v443, %v543
        %v545 = vpop.f32.mrb[0].mxu0
        %546 = vmatprep.mubr.f32.mxu0 0.0
        %547 = vmatmul.mubr.f32.gmra.mrb[0].mxu0 %v451
        %v548 = vpop.f32.mrb[0].mxu0
        %v549 = vadd.f32 %v443, %v548
        %v550 = vpop.f32.mrb[0].mxu0
        %551 = vmatprep.mubr.f32.mxu0 0.0
        %552 = vmatmul.mubr.f32.gmra.mrb[0].mxu0 %v454
        %v553 = vpop.f32.mrb[0].mxu0
        %v554 = vadd.f32 %v443, %v553
        %v555 = vpop.f32.mrb[0].mxu0
        %556 = vmatprep.mubr.f32.mxu0 0.0
        %557 = vmatmul.mubr.f32.gmra.mrb[0].mxu0 %v457
        %v558 = vpop.f32.mrb[0].mxu0
        %v559 = vadd.f32 %v443, %v558
        %v560 = vpop.f32.mrb[0].mxu0
        %561 = vmatprep.mubr.f32.mxu0 0.0
        %562 = vmatmul.mubr.f32.gmra.mrb[0].mxu0 %v460
        %v563 = vpop.f32.mrb[0].mxu0
        %v564 = vadd.f32 %v443, %v563
        %v565 = vpop.f32.mrb[0].mxu0
        %566 = vmatprep.mubr.f32.mxu0 0.0
        %567 = vmatmul.mubr.f32.gmra.mrb[0].mxu0 %v463
        %v568 = vpop.f32.mrb[0].mxu0
        %v569 = vadd.f32 %v443, %v568
        %v570 = vpop.f32.mrb[0].mxu0
        %571 = vmatprep.mubr.f32.mxu0 0.0
        %572 = vmatmul.mubr.f32.gmra.mrb[0].mxu0 %v466
        %v573 = vpop.f32.mrb[0].mxu0
        %v574 = vadd.f32 %v443, %v573
        %v575 = vpop.f32.mrb[0].mxu0
        %576 = vdwg.mxu0
        %vm585 = vcmask 1041409
        %v586 = vsel %vm585, %v380, %v373
        %vm587 = vcmask 1042434
        %v588 = vsel %vm587, %v387, %v586
        %vm589 = vcmask 1043459
        %v590 = vsel %vm589, %v394, %v588
        %vm591 = vcmask 1044484
        %v592 = vsel %vm591, %v401, %v590
        %vm593 = vcmask 1045509
        %v594 = vsel %vm593, %v408, %v592
        %vm595 = vcmask 1046534
        %v596 = vsel %vm595, %v415, %v594
        %vm597 = vcmask 1047559
        %v598 = vsel %vm597, %v422, %v596
        %v599 = vsel %vm366, %v598, 0
        %601 = vmatprep.subr.mxu0 0.0
        %602 = vmatpush1.msra.mxu0 %v470
        %603 = vmatprep.subr.mxu0 0.0
        %604 = vmatpush1.msra.mxu0 0.0
        %605 = vmatprep.subr.mxu0 0.0
        %606 = vmatpush1.msra.mxu0 0.0
        %607 = vmatprep.subr.mxu0 0.0
        %608 = vmatpush1.msra.mxu0 0.0
        %609 = vmatprep.subr.mxu0 0.0
        %610 = vmatpush1.msra.mxu0 0.0
        %611 = vmatprep.subr.mxu0 0.0
        %612 = vmatpush1.msra.mxu0 0.0
        %613 = vmatprep.subr.mxu0 0.0
        %614 = vmatpush1.msra.mxu0 0.0
        %615 = vmatprep.subr.mxu0 0.0
        %616 = vmatpush1.msra.mxu0 0.0
        %617 = vmatprep.subr.mxu0 0.0
        %618 = vmatpush1.msra.mxu0 0.0
        %619 = vmatprep.subr.mxu0 0.0
        %620 = vmatpush1.msra.mxu0 0.0
        %621 = vmatprep.subr.mxu0 0.0
        %622 = vmatpush1.msra.mxu0 0.0
        %623 = vmatprep.subr.mxu0 0.0
        %624 = vmatpush1.msra.mxu0 0.0
        %625 = vmatprep.subr.mxu0 0.0
        %626 = vmatpush1.msra.mxu0 0.0
        %627 = vmatprep.subr.mxu0 0.0
        %628 = vmatpush1.msra.mxu0 0.0
        %629 = vmatprep.subr.mxu0 0.0
        %630 = vmatpush1.msra.mxu0 0.0
        %631 = vmatprep.subr.mxu0 0.0
        %632 = vmatpush1.msra.mxu0 0.0
        %633 = vmatprep.subr.mxu0 0.0
        %634 = vmatpush1.msra.mxu0 0.0
        %635 = vmatprep.subr.mxu0 0.0
        %636 = vmatpush1.msra.mxu0 0.0
        %637 = vmatprep.subr.mxu0 0.0
        %638 = vmatpush1.msra.mxu0 0.0
        %639 = vmatprep.subr.mxu0 0.0
        %640 = vmatpush1.msra.mxu0 0.0
        %641 = vmatprep.subr.mxu0 0.0
        %642 = vmatpush1.msra.mxu0 0.0
        %643 = vmatprep.subr.mxu0 0.0
        %644 = vmatpush1.msra.mxu0 0.0
        %645 = vmatprep.subr.mxu0 0.0
        %646 = vmatpush1.msra.mxu0 0.0
        %647 = vmatprep.subr.mxu0 0.0
        %648 = vmatpush1.msra.mxu0 0.0
        %649 = vmatprep.subr.mxu0 0.0
        %650 = vmatpush1.msra.mxu0 0.0
        %651 = vmatprep.subr.mxu0 0.0
        %652 = vmatpush1.msra.mxu0 0.0
        %653 = vmatprep.subr.mxu0 0.0
        %654 = vmatpush1.msra.mxu0 0.0
        %655 = vmatprep.subr.mxu0 0.0
        %656 = vmatpush1.msra.mxu0 0.0
        %657 = vmatprep.subr.mxu0 0.0
        %658 = vmatpush1.msra.mxu0 0.0
        %659 = vmatprep.subr.mxu0 0.0
        %660 = vmatpush1.msra.mxu0 0.0
        %661 = vmatprep.subr.mxu0 0.0
        %662 = vmatpush1.msra.mxu0 0.0
        %663 = vmatprep.subr.mxu0 0.0
        %664 = vmatpush1.msra.mxu0 0.0
        %665 = vmatprep.mubr.f32.mxu0 0.0
        %666 = vmatmul.mubr.f32.gmra.mrb[0].mxu0 %v599
        %v667 = vpop.f32.mrb[0].mxu0
        %v668 = vadd.f32 0.0, %v667
        %v669 = vpop.f32.mrb[0].mxu0
        %670 = vdwg.mxu0
        %v671 = vmul.f32 %v668, %v432
        %v672 = vadd.f32 %v671, %v443
        %v673 = vmul.f32 %v672, %v429
        %v674 = vld [vmem:[%s4 + $0x40] sm:$0xff]
        %v675 = vld [vmem:[%s4 + $0x48] sm:$0xff]
        %v676 = vld [vmem:[%s4 + $0x50] sm:$0xff]
        %v677 = vld [vmem:[%s4 + $0x58] sm:$0x1]
        %v678 = vld [vmem:[%s4 + $0x60] sm:$0xff]
        %v679 = vld [vmem:[%s4 + $0x68] sm:$0xff]
        %v680 = vld [vmem:[%s4 + $0x70] sm:$0xff]
        %v681 = vld [vmem:[%s4 + $0x78] sm:$0x1]
        %v682 = vld [vmem:[%s4 + $0x80] sm:$0x1]
        %v683 = vld [vmem:[%s4 + $0x88] sm:$0x1]
        %v684 = vlaneseq
        %v685 = vshrl.u32 %v684, 7
        %v686 = vsub.s32 0, %v685
        %v687 = vrot.slane %v677, %v686
        %vm688 = vcmask 195584
        %v690 = vsel %vm688, %v354, 0
        %692 = vmatprep.subr.mxu0 0.0
        %693 = vmatpush1.msra.mxu0 %v674
        %694 = vmatprep.subr.mxu0 0.0
        %695 = vmatpush1.msra.mxu0 %v675
        %696 = vmatprep.subr.mxu0 0.0
        %697 = vmatpush1.msra.mxu0 %v676
        %698 = vmatprep.subr.mxu0 0.0
        %699 = vmatpush1.msra.mxu0 0.0
        %700 = vmatprep.subr.mxu0 0.0
        %701 = vmatpush1.msra.mxu0 0.0
        %702 = vmatprep.subr.mxu0 0.0
        %703 = vmatpush1.msra.mxu0 0.0
        %704 = vmatprep.subr.mxu0 0.0
        %705 = vmatpush1.msra.mxu0 0.0
        %706 = vmatprep.subr.mxu0 0.0
        %707 = vmatpush1.msra.mxu0 0.0
        %708 = vmatprep.subr.mxu0 0.0
        %709 = vmatpush1.msra.mxu0 0.0
        %710 = vmatprep.subr.mxu0 0.0
        %711 = vmatpush1.msra.mxu0 0.0
        %712 = vmatprep.subr.mxu0 0.0
        %713 = vmatpush1.msra.mxu0 0.0
        %714 = vmatprep.subr.mxu0 0.0
        %715 = vmatpush1.msra.mxu0 0.0
        %716 = vmatprep.subr.mxu0 0.0
        %717 = vmatpush1.msra.mxu0 0.0
        %718 = vmatprep.subr.mxu0 0.0
        %719 = vmatpush1.msra.mxu0 0.0
        %720 = vmatprep.subr.mxu0 0.0
        %721 = vmatpush1.msra.mxu0 0.0
        %722 = vmatprep.subr.mxu0 0.0
        %723 = vmatpush1.msra.mxu0 0.0
        %724 = vmatprep.subr.mxu0 0.0
        %725 = vmatpush1.msra.mxu0 0.0
        %726 = vmatprep.subr.mxu0 0.0
        %727 = vmatpush1.msra.mxu0 0.0
        %728 = vmatprep.subr.mxu0 0.0
        %729 = vmatpush1.msra.mxu0 0.0
        %730 = vmatprep.subr.mxu0 0.0
        %731 = vmatpush1.msra.mxu0 0.0
        %732 = vmatprep.subr.mxu0 0.0
        %733 = vmatpush1.msra.mxu0 0.0
        %734 = vmatprep.subr.mxu0 0.0
        %735 = vmatpush1.msra.mxu0 0.0
        %736 = vmatprep.subr.mxu0 0.0
        %737 = vmatpush1.msra.mxu0 0.0
        %738 = vmatprep.subr.mxu0 0.0
        %739 = vmatpush1.msra.mxu0 0.0
        %740 = vmatprep.subr.mxu0 0.0
        %741 = vmatpush1.msra.mxu0 0.0
        %742 = vmatprep.subr.mxu0 0.0
        %743 = vmatpush1.msra.mxu0 0.0
        %744 = vmatprep.subr.mxu0 0.0
        %745 = vmatpush1.msra.mxu0 0.0
        %746 = vmatprep.subr.mxu0 0.0
        %747 = vmatpush1.msra.mxu0 0.0
        %748 = vmatprep.subr.mxu0 0.0
        %749 = vmatpush1.msra.mxu0 0.0
        %750 = vmatprep.subr.mxu0 0.0
        %751 = vmatpush1.msra.mxu0 0.0
        %752 = vmatprep.subr.mxu0 0.0
        %753 = vmatpush1.msra.mxu0 0.0
        %754 = vmatprep.subr.mxu0 0.0
        %755 = vmatpush1.msra.mxu0 0.0
        %756 = vmatprep.mubr.f32.mxu0 0.0
        %757 = vmatmul.mubr.f32.gmra.mrb[0].mxu0 %v690
        %v758 = vpop.f32.mrb[0].mxu0
        %v759 = vadd.f32 %v687, %v758
        %v760 = vpop.f32.mrb[0].mxu0
        %761 = vdwg.mxu0
        %v762 = vlaneseq
        %v763 = vshrl.u32 %v762, 7
        %v764 = vsub.s32 0, %v763
        %v765 = vrot.slane %v681, %v764
        %766 = vmatprep.subr.mxu0 0.0
        %767 = vmatpush1.msra.mxu0 %v678
        %768 = vmatprep.subr.mxu0 0.0
        %769 = vmatpush1.msra.mxu0 %v679
        %770 = vmatprep.subr.mxu0 0.0
        %771 = vmatpush1.msra.mxu0 %v680
        %772 = vmatprep.subr.mxu0 0.0
        %773 = vmatpush1.msra.mxu0 0.0
        %774 = vmatprep.subr.mxu0 0.0
        %775 = vmatpush1.msra.mxu0 0.0
        %776 = vmatprep.subr.mxu0 0.0
        %777 = vmatpush1.msra.mxu0 0.0
        %778 = vmatprep.subr.mxu0 0.0
        %779 = vmatpush1.msra.mxu0 0.0
        %780 = vmatprep.subr.mxu0 0.0
        %781 = vmatpush1.msra.mxu0 0.0
        %782 = vmatprep.subr.mxu0 0.0
        %783 = vmatpush1.msra.mxu0 0.0
        %784 = vmatprep.subr.mxu0 0.0
        %785 = vmatpush1.msra.mxu0 0.0
        %786 = vmatprep.subr.mxu0 0.0
        %787 = vmatpush1.msra.mxu0 0.0
        %788 = vmatprep.subr.mxu0 0.0
        %789 = vmatpush1.msra.mxu0 0.0
        %790 = vmatprep.subr.mxu0 0.0
        %791 = vmatpush1.msra.mxu0 0.0
        %792 = vmatprep.subr.mxu0 0.0
        %793 = vmatpush1.msra.mxu0 0.0
        %794 = vmatprep.subr.mxu0 0.0
        %795 = vmatpush1.msra.mxu0 0.0
        %796 = vmatprep.subr.mxu0 0.0
        %797 = vmatpush1.msra.mxu0 0.0
        %798 = vmatprep.subr.mxu0 0.0
        %799 = vmatpush1.msra.mxu0 0.0
        %800 = vmatprep.subr.mxu0 0.0
        %801 = vmatpush1.msra.mxu0 0.0
        %802 = vmatprep.subr.mxu0 0.0
        %803 = vmatpush1.msra.mxu0 0.0
        %804 = vmatprep.subr.mxu0 0.0
        %805 = vmatpush1.msra.mxu0 0.0
        %806 = vmatprep.subr.mxu0 0.0
        %807 = vmatpush1.msra.mxu0 0.0
        %808 = vmatprep.subr.mxu0 0.0
        %809 = vmatpush1.msra.mxu0 0.0
        %810 = vmatprep.subr.mxu0 0.0
        %811 = vmatpush1.msra.mxu0 0.0
        %812 = vmatprep.subr.mxu0 0.0
        %813 = vmatpush1.msra.mxu0 0.0
        %814 = vmatprep.subr.mxu0 0.0
        %815 = vmatpush1.msra.mxu0 0.0
        %816 = vmatprep.subr.mxu0 0.0
        %817 = vmatpush1.msra.mxu0 0.0
        %818 = vmatprep.subr.mxu0 0.0
        %819 = vmatpush1.msra.mxu0 0.0
        %820 = vmatprep.subr.mxu0 0.0
        %821 = vmatpush1.msra.mxu0 0.0
        %822 = vmatprep.subr.mxu0 0.0
        %823 = vmatpush1.msra.mxu0 0.0
        %824 = vmatprep.subr.mxu0 0.0
        %825 = vmatpush1.msra.mxu0 0.0
        %826 = vmatprep.subr.mxu0 0.0
        %827 = vmatpush1.msra.mxu0 0.0
        %828 = vmatprep.subr.mxu0 0.0
        %829 = vmatpush1.msra.mxu0 0.0
        %830 = vmatprep.mubr.f32.mxu0 0.0
        %831 = vmatmul.mubr.f32.gmra.mrb[0].mxu0 %v690
        %v832 = vpop.f32.mrb[0].mxu0
        %v833 = vadd.f32 %v765, %v832
        %v834 = vpop.f32.mrb[0].mxu0
        %835 = vdwg.mxu0
        %v837 = vcombine.high %v833, %v833
        %v839 = vunpack.c.l.s4 1966171168
        %v840 = vunpack.c.0.s8 %v839
        %v841 = vlaneseq
        %v842 = vshrl.u32 %v841, 7
        %v843 = vsub.s32 %v840, %v842
        %v844 = vrot.slane %v833, %v843
        %v846 = vunpack.c.l.s4 1966171168
        %v847 = vunpack.c.0.s8 %v846
        %v848 = vlaneseq
        %v849 = vshrl.u32 %v848, 7
        %v850 = vsub.s32 %v847, %v849
        %v851 = vrot.slane %v837, %v850
        %v852 = vcombine.high %v844, %v844
        %v853 = vcombine.high %v851, %v851
        %v855 = vunpack.c.l.s4 1966171168
        %v856 = vunpack.c.0.s8 %v855
        %v857 = vlaneseq
        %v858 = vshrl.u32 %v857, 7
        %v859 = vsub.s32 %v856, %v858
        %v860 = vrot.slane %v844, %v859
        %v862 = vunpack.c.l.s4 1966171168
        %v863 = vunpack.c.0.s8 %v862
        %v864 = vlaneseq
        %v865 = vshrl.u32 %v864, 7
        %v866 = vsub.s32 %v863, %v865
        %v867 = vrot.slane %v851, %v866
        %v869 = vunpack.c.l.s4 1966171168
        %v870 = vunpack.c.0.s8 %v869
        %v871 = vlaneseq
        %v872 = vshrl.u32 %v871, 7
        %v873 = vsub.s32 %v870, %v872
        %v874 = vrot.slane %v852, %v873
        %v876 = vunpack.c.l.s4 1966171168
        %v877 = vunpack.c.0.s8 %v876
        %v878 = vlaneseq
        %v879 = vshrl.u32 %v878, 7
        %v880 = vsub.s32 %v877, %v879
        %v881 = vrot.slane %v853, %v880
        %v882 = vcombine.high %v860, %v860
        %v883 = vcombine.high %v867, %v867
        %v884 = vcombine.high %v874, %v874
        %v885 = vcombine.high %v881, %v881
        %v886 = vlaneseq
        %v887 = vshrl.u32 %v886, 7
        %v888 = vsub.s32 0, %v887
        %v889 = vrot.slane %v860, %v888
        %v890 = vlaneseq
        %v891 = vshrl.u32 %v890, 7
        %v892 = vsub.s32 0, %v891
        %v893 = vrot.slane %v874, %v892
        %v894 = vlaneseq
        %v895 = vshrl.u32 %v894, 7
        %v896 = vsub.s32 0, %v895
        %v897 = vrot.slane %v882, %v896
        %v898 = vlaneseq
        %v899 = vshrl.u32 %v898, 7
        %v900 = vsub.s32 0, %v899
        %v901 = vrot.slane %v884, %v900
        %v902 = vlaneseq
        %v903 = vshrl.u32 %v902, 7
        %v904 = vsub.s32 0, %v903
        %v905 = vrot.slane %v867, %v904
        %v906 = vlaneseq
        %v907 = vshrl.u32 %v906, 7
        %v908 = vsub.s32 0, %v907
        %v909 = vrot.slane %v881, %v908
        %v910 = vlaneseq
        %v911 = vshrl.u32 %v910, 7
        %v912 = vsub.s32 0, %v911
        %v913 = vrot.slane %v883, %v912
        %v914 = vlaneseq
        %v915 = vshrl.u32 %v914, 7
        %v916 = vsub.s32 0, %v915
        %v917 = vrot.slane %v885, %v916
        %v926 = vadd.f32 %v889, %v759
        %v927 = vadd.f32 %v893, %v759
        %v928 = vadd.f32 %v897, %v759
        %v929 = vadd.f32 %v901, %v759
        %v930 = vadd.f32 %v905, %v759
        %v931 = vadd.f32 %v909, %v759
        %v932 = vadd.f32 %v913, %v759
        %v933 = vadd.f32 %v917, %v759
        %v934 = vadd.f32 %v926, %v539
        %v935 = vadd.f32 %v927, %v544
        %v936 = vadd.f32 %v928, %v549
        %v937 = vadd.f32 %v929, %v554
        %v938 = vadd.f32 %v930, %v559
        %v939 = vadd.f32 %v931, %v564
        %v940 = vadd.f32 %v932, %v569
        %v941 = vadd.f32 %v933, %v574
        %vm942 = vcmp.gt.f32.partialorder %v934, 0.0
        %vm943 = vcmp.gt.f32.partialorder %v935, 0.0
        %vm944 = vcmp.gt.f32.partialorder %v936, 0.0
        %vm945 = vcmp.gt.f32.partialorder %v937, 0.0
        %vm946 = vcmp.gt.f32.partialorder %v938, 0.0
        %vm947 = vcmp.gt.f32.partialorder %v939, 0.0
        %vm948 = vcmp.gt.f32.partialorder %v940, 0.0
        %vm949 = vcmp.gt.f32.partialorder %v941, 0.0
        %v950 = vmul.f32 %v934, 0.2
        %v951 = vmul.f32 %v935, 0.2
        %v952 = vmul.f32 %v936, 0.2
        %v953 = vmul.f32 %v937, 0.2
        %v954 = vmul.f32 %v938, 0.2
        %v955 = vmul.f32 %v939, 0.2
        %v956 = vmul.f32 %v940, 0.2
        %v957 = vmul.f32 %v941, 0.2
        %v958 = vsel %vm942, %v934, %v950
        %v959 = vsel %vm943, %v935, %v951
        %v960 = vsel %vm944, %v936, %v952
        %v961 = vsel %vm945, %v937, %v953
        %v962 = vsel %vm946, %v938, %v954
        %v963 = vsel %vm947, %v939, %v955
        %v964 = vsel %vm948, %v940, %v956
        %v965 = vsel %vm949, %v941, %v957
        %v966 = vlaneseq
        %v967 = vshrl.u32 %v966, 7
        %v968 = vsub.s32 0, %v967
        %v969 = vrot.slane %v682, %v968
        %v970 = vmul.f32 %v958, %v969
        %v971 = vmul.f32 %v959, %v969
        %v972 = vmul.f32 %v960, %v969
        %v973 = vmul.f32 %v961, %v969
        %v974 = vmul.f32 %v962, %v969
        %v975 = vmul.f32 %v963, %v969
        %v976 = vmul.f32 %v964, %v969
        %v977 = vmul.f32 %v965, %v969
        %v978 = vsel %vm688, %v970, 0.0
        %979 = vadd.xlane.f32.xlu0 %v978
        %v980 = vpop.xlane.xlu0 %979
        %v981 = vsel %vm688, %v971, 0.0
        %982 = vadd.xlane.f32.xlu0 %v981
        %v983 = vpop.xlane.xlu0 %982
        %v984 = vsel %vm688, %v972, 0.0
        %985 = vadd.xlane.f32.xlu0 %v984
        %v986 = vpop.xlane.xlu0 %985
        %v987 = vsel %vm688, %v973, 0.0
        %988 = vadd.xlane.f32.xlu0 %v987
        %v989 = vpop.xlane.xlu0 %988
        %v990 = vsel %vm688, %v974, 0.0
        %991 = vadd.xlane.f32.xlu0 %v990
        %v992 = vpop.xlane.xlu0 %991
        %v993 = vsel %vm688, %v975, 0.0
        %994 = vadd.xlane.f32.xlu0 %v993
        %v995 = vpop.xlane.xlu0 %994
        %v996 = vsel %vm688, %v976, 0.0
        %997 = vadd.xlane.f32.xlu0 %v996
        %v998 = vpop.xlane.xlu0 %997
        %v999 = vsel %vm688, %v977, 0.0
        %1000 = vadd.xlane.f32.xlu0 %v999
        %v1001 = vpop.xlane.xlu0 %1000
        %v1002 = vadd.f32 %v833, %v759
        %v1003 = vadd.f32 %v1002, %v673
        %vm1004 = vcmp.gt.f32.partialorder %v1003, 0.0
        %v1005 = vmul.f32 %v1003, 0.2
        %v1006 = vsel %vm1004, %v1003, %v1005
        %v1007 = vmul.f32 %v1006, %v969
        %v1008 = vsel %vm688, %v1007, 0.0
        %1009 = vadd.xlane.f32.xlu0 %v1008
        %v1010 = vpop.xlane.xlu0 %1009
        %vm1011 = vcmp.gt.f32.partialorder %v357, 0.0
        %v1020 = vlaneseq
        %v1021 = vshrl.u32 %v1020, 7
        %v1022 = vsub.s32 %v436, %v1021
        %v1023 = vrot.slane %v980, %v1022
        %v1024 = vlaneseq
        %v1025 = vshrl.u32 %v1024, 7
        %v1026 = vsub.s32 %v436, %v1025
        %v1027 = vrot.slane %v983, %v1026
        %v1028 = vlaneseq
        %v1029 = vshrl.u32 %v1028, 7
        %v1030 = vsub.s32 %v436, %v1029
        %v1031 = vrot.slane %v986, %v1030
        %v1032 = vlaneseq
        %v1033 = vshrl.u32 %v1032, 7
        %v1034 = vsub.s32 %v436, %v1033
        %v1035 = vrot.slane %v989, %v1034
        %v1036 = vlaneseq
        %v1037 = vshrl.u32 %v1036, 7
        %v1038 = vsub.s32 %v436, %v1037
        %v1039 = vrot.slane %v992, %v1038
        %v1040 = vlaneseq
        %v1041 = vshrl.u32 %v1040, 7
        %v1042 = vsub.s32 %v436, %v1041
        %v1043 = vrot.slane %v995, %v1042
        %v1044 = vlaneseq
        %v1045 = vshrl.u32 %v1044, 7
        %v1046 = vsub.s32 %v436, %v1045
        %v1047 = vrot.slane %v998, %v1046
        %v1048 = vlaneseq
        %v1049 = vshrl.u32 %v1048, 7
        %v1050 = vsub.s32 %v436, %v1049
        %v1051 = vrot.slane %v1001, %v1050
        %v1052 = vsel %vm585, %v1027, %v1023
        %v1053 = vsel %vm587, %v1031, %v1052
        %v1054 = vsel %vm589, %v1035, %v1053
        %v1055 = vsel %vm591, %v1039, %v1054
        %v1056 = vsel %vm593, %v1043, %v1055
        %v1057 = vsel %vm595, %v1047, %v1056
        %v1058 = vsel %vm597, %v1051, %v1057
        %v1060 = vsel %vm1011, %v1058, -1e+30
        %v1061 = vsel %vm437, %v1010, %v1060
        %v1062 = vsel %vm423, %v1061, -inf
        %1063 = vmax.xlane.f32.xlu0 %v1062
        %v1064 = vpop.xlane.xlu0 %1063
        %v1065 = vsub.f32 %v1061, %v1064
        %v1066 = vmul.f32 %v1065, 1.442695
        %v1067 = vpow.pop %v1066
        %v1068 = vsel %vm423, %v1067, 0.0
        %1069 = vadd.xlane.f32.xlu0 %v1068
        %v1070 = vpop.xlane.xlu0 %1069
        %v1071 = vrcp.pop %v1070
        %v1072 = vmul.f32 %v1067, %v1071
        %v1073 = vlaneseq
        %v1074 = vshrl.u32 %v1073, 7
        %v1075 = vsub.s32 0, %v1074
        %v1076 = vrot.slane %v683, %v1075
        %v1078 = vsel %vm423, %v1072, 0
        %1080 = vmatprep.subr.mxu0 0.0
        %1081 = vmatpush1.msra.mxu0 %v759
        %1082 = vmatprep.subr.mxu0 0.0
        %1083 = vmatpush1.msra.mxu0 0.0
        %1084 = vmatprep.subr.mxu0 0.0
        %1085 = vmatpush1.msra.mxu0 0.0
        %1086 = vmatprep.subr.mxu0 0.0
        %1087 = vmatpush1.msra.mxu0 0.0
        %1088 = vmatprep.subr.mxu0 0.0
        %1089 = vmatpush1.msra.mxu0 0.0
        %1090 = vmatprep.subr.mxu0 0.0
        %1091 = vmatpush1.msra.mxu0 0.0
        %1092 = vmatprep.subr.mxu0 0.0
        %1093 = vmatpush1.msra.mxu0 0.0
        %1094 = vmatprep.subr.mxu0 0.0
        %1095 = vmatpush1.msra.mxu0 0.0
        %1096 = vmatprep.subr.mxu0 0.0
        %1097 = vmatpush1.msra.mxu0 0.0
        %1098 = vmatprep.subr.mxu0 0.0
        %1099 = vmatpush1.msra.mxu0 0.0
        %1100 = vmatprep.subr.mxu0 0.0
        %1101 = vmatpush1.msra.mxu0 0.0
        %1102 = vmatprep.subr.mxu0 0.0
        %1103 = vmatpush1.msra.mxu0 0.0
        %1104 = vmatprep.subr.mxu0 0.0
        %1105 = vmatpush1.msra.mxu0 0.0
        %1106 = vmatprep.subr.mxu0 0.0
        %1107 = vmatpush1.msra.mxu0 0.0
        %1108 = vmatprep.subr.mxu0 0.0
        %1109 = vmatpush1.msra.mxu0 0.0
        %1110 = vmatprep.subr.mxu0 0.0
        %1111 = vmatpush1.msra.mxu0 0.0
        %1112 = vmatprep.subr.mxu0 0.0
        %1113 = vmatpush1.msra.mxu0 0.0
        %1114 = vmatprep.subr.mxu0 0.0
        %1115 = vmatpush1.msra.mxu0 0.0
        %1116 = vmatprep.subr.mxu0 0.0
        %1117 = vmatpush1.msra.mxu0 0.0
        %1118 = vmatprep.subr.mxu0 0.0
        %1119 = vmatpush1.msra.mxu0 0.0
        %1120 = vmatprep.subr.mxu0 0.0
        %1121 = vmatpush1.msra.mxu0 0.0
        %1122 = vmatprep.subr.mxu0 0.0
        %1123 = vmatpush1.msra.mxu0 0.0
        %1124 = vmatprep.subr.mxu0 0.0
        %1125 = vmatpush1.msra.mxu0 0.0
        %1126 = vmatprep.subr.mxu0 0.0
        %1127 = vmatpush1.msra.mxu0 0.0
        %1128 = vmatprep.subr.mxu0 0.0
        %1129 = vmatpush1.msra.mxu0 0.0
        %1130 = vmatprep.subr.mxu0 0.0
        %1131 = vmatpush1.msra.mxu0 0.0
        %1132 = vmatprep.subr.mxu0 0.0
        %1133 = vmatpush1.msra.mxu0 0.0
        %1134 = vmatprep.subr.mxu0 0.0
        %1135 = vmatpush1.msra.mxu0 0.0
        %1136 = vmatprep.subr.mxu0 0.0
        %1137 = vmatpush1.msra.mxu0 0.0
        %1138 = vmatprep.subr.mxu0 0.0
        %1139 = vmatpush1.msra.mxu0 0.0
        %1140 = vmatprep.subr.mxu0 0.0
        %1141 = vmatpush1.msra.mxu0 0.0
        %1142 = vmatprep.subr.mxu0 0.0
        %1143 = vmatpush1.msra.mxu0 0.0
        %1144 = vmatprep.mubr.f32.mxu0 0.0
        %1145 = vmatmul.mubr.f32.gmra.mrb[0].mxu0 %v1078
        %v1146 = vpop.f32.mrb[0].mxu0
        %v1147 = vadd.f32 %v1076, %v1146
        %v1148 = vpop.f32.mrb[0].mxu0
        %1149 = vdwg.mxu0
        %v1150 = vmax.f32 %v1147, 0.0
        %v1151 = vld [vmem:[%s4 + $0x30] sm:$0xf]
        %v1152 = vld [vmem:[%s4 + $0x38] sm:$0x1]
        %v1153 = vlaneseq
        %v1154 = vshrl.u32 %v1153, 7
        %v1155 = vsub.s32 0, %v1154
        %v1156 = vrot.slane %v1152, %v1155
        %v1158 = vsel %vm468, %v1151, 0
        %1160 = vmatprep.subr.mxu0 0.0
        %1161 = vmatpush1.msra.mxu0 %v1158
        %1162 = vmatprep.subr.mxu0 0.0
        %1163 = vmatpush1.msra.mxu0 0.0
        %1164 = vmatprep.subr.mxu0 0.0
        %1165 = vmatpush1.msra.mxu0 0.0
        %1166 = vmatprep.subr.mxu0 0.0
        %1167 = vmatpush1.msra.mxu0 0.0
        %1168 = vmatprep.subr.mxu0 0.0
        %1169 = vmatpush1.msra.mxu0 0.0
        %1170 = vmatprep.subr.mxu0 0.0
        %1171 = vmatpush1.msra.mxu0 0.0
        %1172 = vmatprep.subr.mxu0 0.0
        %1173 = vmatpush1.msra.mxu0 0.0
        %1174 = vmatprep.subr.mxu0 0.0
        %1175 = vmatpush1.msra.mxu0 0.0
        %1176 = vmatprep.subr.mxu0 0.0
        %1177 = vmatpush1.msra.mxu0 0.0
        %1178 = vmatprep.subr.mxu0 0.0
        %1179 = vmatpush1.msra.mxu0 0.0
        %1180 = vmatprep.subr.mxu0 0.0
        %1181 = vmatpush1.msra.mxu0 0.0
        %1182 = vmatprep.subr.mxu0 0.0
        %1183 = vmatpush1.msra.mxu0 0.0
        %1184 = vmatprep.subr.mxu0 0.0
        %1185 = vmatpush1.msra.mxu0 0.0
        %1186 = vmatprep.subr.mxu0 0.0
        %1187 = vmatpush1.msra.mxu0 0.0
        %1188 = vmatprep.subr.mxu0 0.0
        %1189 = vmatpush1.msra.mxu0 0.0
        %1190 = vmatprep.subr.mxu0 0.0
        %1191 = vmatpush1.msra.mxu0 0.0
        %1192 = vmatprep.subr.mxu0 0.0
        %1193 = vmatpush1.msra.mxu0 0.0
        %1194 = vmatprep.subr.mxu0 0.0
        %1195 = vmatpush1.msra.mxu0 0.0
        %1196 = vmatprep.subr.mxu0 0.0
        %1197 = vmatpush1.msra.mxu0 0.0
        %1198 = vmatprep.subr.mxu0 0.0
        %1199 = vmatpush1.msra.mxu0 0.0
        %1200 = vmatprep.subr.mxu0 0.0
        %1201 = vmatpush1.msra.mxu0 0.0
        %1202 = vmatprep.subr.mxu0 0.0
        %1203 = vmatpush1.msra.mxu0 0.0
        %1204 = vmatprep.subr.mxu0 0.0
        %1205 = vmatpush1.msra.mxu0 0.0
        %1206 = vmatprep.subr.mxu0 0.0
        %1207 = vmatpush1.msra.mxu0 0.0
        %1208 = vmatprep.subr.mxu0 0.0
        %1209 = vmatpush1.msra.mxu0 0.0
        %1210 = vmatprep.subr.mxu0 0.0
        %1211 = vmatpush1.msra.mxu0 0.0
        %1212 = vmatprep.subr.mxu0 0.0
        %1213 = vmatpush1.msra.mxu0 0.0
        %1214 = vmatprep.subr.mxu0 0.0
        %1215 = vmatpush1.msra.mxu0 0.0
        %1216 = vmatprep.subr.mxu0 0.0
        %1217 = vmatpush1.msra.mxu0 0.0
        %1218 = vmatprep.subr.mxu0 0.0
        %1219 = vmatpush1.msra.mxu0 0.0
        %1220 = vmatprep.subr.mxu0 0.0
        %1221 = vmatpush1.msra.mxu0 0.0
        %1222 = vmatprep.subr.mxu0 0.0
        %1223 = vmatpush1.msra.mxu0 0.0
        %1224 = vmatprep.mubr.f32.mxu0 0.0
        %1225 = vmatmul.mubr.f32.gmra.mrb[0].mxu0 %v445
        %v1226 = vpop.f32.mrb[0].mxu0
        %v1227 = vadd.f32 %v1156, %v1226
        %v1228 = vpop.f32.mrb[0].mxu0
        %1229 = vmatprep.mubr.f32.mxu0 0.0
        %1230 = vmatmul.mubr.f32.gmra.mrb[0].mxu0 %v448
        %v1231 = vpop.f32.mrb[0].mxu0
        %v1232 = vadd.f32 %v1156, %v1231
        %v1233 = vpop.f32.mrb[0].mxu0
        %1234 = vmatprep.mubr.f32.mxu0 0.0
        %1235 = vmatmul.mubr.f32.gmra.mrb[0].mxu0 %v451
        %v1236 = vpop.f32.mrb[0].mxu0
        %v1237 = vadd.f32 %v1156, %v1236
        %v1238 = vpop.f32.mrb[0].mxu0
        %1239 = vmatprep.mubr.f32.mxu0 0.0
        %1240 = vmatmul.mubr.f32.gmra.mrb[0].mxu0 %v454
        %v1241 = vpop.f32.mrb[0].mxu0
        %v1242 = vadd.f32 %v1156, %v1241
        %v1243 = vpop.f32.mrb[0].mxu0
        %1244 = vmatprep.mubr.f32.mxu0 0.0
        %1245 = vmatmul.mubr.f32.gmra.mrb[0].mxu0 %v457
        %v1246 = vpop.f32.mrb[0].mxu0
        %v1247 = vadd.f32 %v1156, %v1246
        %v1248 = vpop.f32.mrb[0].mxu0
        %1249 = vmatprep.mubr.f32.mxu0 0.0
        %1250 = vmatmul.mubr.f32.gmra.mrb[0].mxu0 %v460
        %v1251 = vpop.f32.mrb[0].mxu0
        %v1252 = vadd.f32 %v1156, %v1251
        %v1253 = vpop.f32.mrb[0].mxu0
        %1254 = vmatprep.mubr.f32.mxu0 0.0
        %1255 = vmatmul.mubr.f32.gmra.mrb[0].mxu0 %v463
        %v1256 = vpop.f32.mrb[0].mxu0
        %v1257 = vadd.f32 %v1156, %v1256
        %v1258 = vpop.f32.mrb[0].mxu0
        %1259 = vmatprep.mubr.f32.mxu0 0.0
        %1260 = vmatmul.mubr.f32.gmra.mrb[0].mxu0 %v466
        %v1261 = vpop.f32.mrb[0].mxu0
        %v1262 = vadd.f32 %v1156, %v1261
        %v1263 = vpop.f32.mrb[0].mxu0
        %1264 = vdwg.mxu0
        %1265 = vmatprep.subr.mxu0 0.0
        %1266 = vmatpush1.msra.mxu0 %v1158
        %1267 = vmatprep.subr.mxu0 0.0
        %1268 = vmatpush1.msra.mxu0 0.0
        %1269 = vmatprep.subr.mxu0 0.0
        %1270 = vmatpush1.msra.mxu0 0.0
        %1271 = vmatprep.subr.mxu0 0.0
        %1272 = vmatpush1.msra.mxu0 0.0
        %1273 = vmatprep.subr.mxu0 0.0
        %1274 = vmatpush1.msra.mxu0 0.0
        %1275 = vmatprep.subr.mxu0 0.0
        %1276 = vmatpush1.msra.mxu0 0.0
        %1277 = vmatprep.subr.mxu0 0.0
        %1278 = vmatpush1.msra.mxu0 0.0
        %1279 = vmatprep.subr.mxu0 0.0
        %1280 = vmatpush1.msra.mxu0 0.0
        %1281 = vmatprep.subr.mxu0 0.0
        %1282 = vmatpush1.msra.mxu0 0.0
        %1283 = vmatprep.subr.mxu0 0.0
        %1284 = vmatpush1.msra.mxu0 0.0
        %1285 = vmatprep.subr.mxu0 0.0
        %1286 = vmatpush1.msra.mxu0 0.0
        %1287 = vmatprep.subr.mxu0 0.0
        %1288 = vmatpush1.msra.mxu0 0.0
        %1289 = vmatprep.subr.mxu0 0.0
        %1290 = vmatpush1.msra.mxu0 0.0
        %1291 = vmatprep.subr.mxu0 0.0
        %1292 = vmatpush1.msra.mxu0 0.0
        %1293 = vmatprep.subr.mxu0 0.0
        %1294 = vmatpush1.msra.mxu0 0.0
        %1295 = vmatprep.subr.mxu0 0.0
        %1296 = vmatpush1.msra.mxu0 0.0
        %1297 = vmatprep.subr.mxu0 0.0
        %1298 = vmatpush1.msra.mxu0 0.0
        %1299 = vmatprep.subr.mxu0 0.0
        %1300 = vmatpush1.msra.mxu0 0.0
        %1301 = vmatprep.subr.mxu0 0.0
        %1302 = vmatpush1.msra.mxu0 0.0
        %1303 = vmatprep.subr.mxu0 0.0
        %1304 = vmatpush1.msra.mxu0 0.0
        %1305 = vmatprep.subr.mxu0 0.0
        %1306 = vmatpush1.msra.mxu0 0.0
        %1307 = vmatprep.subr.mxu0 0.0
        %1308 = vmatpush1.msra.mxu0 0.0
        %1309 = vmatprep.subr.mxu0 0.0
        %1310 = vmatpush1.msra.mxu0 0.0
        %1311 = vmatprep.subr.mxu0 0.0
        %1312 = vmatpush1.msra.mxu0 0.0
        %1313 = vmatprep.subr.mxu0 0.0
        %1314 = vmatpush1.msra.mxu0 0.0
        %1315 = vmatprep.subr.mxu0 0.0
        %1316 = vmatpush1.msra.mxu0 0.0
        %1317 = vmatprep.subr.mxu0 0.0
        %1318 = vmatpush1.msra.mxu0 0.0
        %1319 = vmatprep.subr.mxu0 0.0
        %1320 = vmatpush1.msra.mxu0 0.0
        %1321 = vmatprep.subr.mxu0 0.0
        %1322 = vmatpush1.msra.mxu0 0.0
        %1323 = vmatprep.subr.mxu0 0.0
        %1324 = vmatpush1.msra.mxu0 0.0
        %1325 = vmatprep.subr.mxu0 0.0
        %1326 = vmatpush1.msra.mxu0 0.0
        %1327 = vmatprep.subr.mxu0 0.0
        %1328 = vmatpush1.msra.mxu0 0.0
        %1329 = vmatprep.mubr.f32.mxu0 0.0
        %1330 = vmatmul.mubr.f32.gmra.mrb[0].mxu0 %v599
        %v1331 = vpop.f32.mrb[0].mxu0
        %v1332 = vadd.f32 0.0, %v1331
        %v1333 = vpop.f32.mrb[0].mxu0
        %1334 = vdwg.mxu0
        %v1335 = vmul.f32 %v1332, %v432
        %v1336 = vadd.f32 %v1335, %v1156
        %v1337 = vmul.f32 %v1336, %v429
        %v1338 = vld [vmem:[%s4 + $0x90] sm:$0xff]
        %v1339 = vld [vmem:[%s4 + $0x98] sm:$0xff]
        %v1340 = vld [vmem:[%s4 + $0xa0] sm:$0xff]
        %v1341 = vld [vmem:[%s4 + $0xa8] sm:$0x1]
        %v1342 = vld [vmem:[%s4 + $0xb0] sm:$0xff]
        %v1343 = vld [vmem:[%s4 + $0xb8] sm:$0xff]
        %v1344 = vld [vmem:[%s4 + $0xc0] sm:$0xff]
        %v1345 = vld [vmem:[%s4 + $0xc8] sm:$0x1]
        %v1346 = vld [vmem:[%s4 + $0xd0] sm:$0x1]
        %v1347 = vld [vmem:[%s4 + $0xd8] sm:$0x1]
        %v1348 = vlaneseq
        %v1349 = vshrl.u32 %v1348, 7
        %v1350 = vsub.s32 0, %v1349
        %v1351 = vrot.slane %v1341, %v1350
        %v1353 = vsel %vm688, %v1150, 0
        %1355 = vmatprep.subr.mxu0 0.0
        %1356 = vmatpush1.msra.mxu0 %v1338
        %1357 = vmatprep.subr.mxu0 0.0
        %1358 = vmatpush1.msra.mxu0 %v1339
        %1359 = vmatprep.subr.mxu0 0.0
        %1360 = vmatpush1.msra.mxu0 %v1340
        %1361 = vmatprep.subr.mxu0 0.0
        %1362 = vmatpush1.msra.mxu0 0.0
        %1363 = vmatprep.subr.mxu0 0.0
        %1364 = vmatpush1.msra.mxu0 0.0
        %1365 = vmatprep.subr.mxu0 0.0
        %1366 = vmatpush1.msra.mxu0 0.0
        %1367 = vmatprep.subr.mxu0 0.0
        %1368 = vmatpush1.msra.mxu0 0.0
        %1369 = vmatprep.subr.mxu0 0.0
        %1370 = vmatpush1.msra.mxu0 0.0
        %1371 = vmatprep.subr.mxu0 0.0
        %1372 = vmatpush1.msra.mxu0 0.0
        %1373 = vmatprep.subr.mxu0 0.0
        %1374 = vmatpush1.msra.mxu0 0.0
        %1375 = vmatprep.subr.mxu0 0.0
        %1376 = vmatpush1.msra.mxu0 0.0
        %1377 = vmatprep.subr.mxu0 0.0
        %1378 = vmatpush1.msra.mxu0 0.0
        %1379 = vmatprep.subr.mxu0 0.0
        %1380 = vmatpush1.msra.mxu0 0.0
        %1381 = vmatprep.subr.mxu0 0.0
        %1382 = vmatpush1.msra.mxu0 0.0
        %1383 = vmatprep.subr.mxu0 0.0
        %1384 = vmatpush1.msra.mxu0 0.0
        %1385 = vmatprep.subr.mxu0 0.0
        %1386 = vmatpush1.msra.mxu0 0.0
        %1387 = vmatprep.subr.mxu0 0.0
        %1388 = vmatpush1.msra.mxu0 0.0
        %1389 = vmatprep.subr.mxu0 0.0
        %1390 = vmatpush1.msra.mxu0 0.0
        %1391 = vmatprep.subr.mxu0 0.0
        %1392 = vmatpush1.msra.mxu0 0.0
        %1393 = vmatprep.subr.mxu0 0.0
        %1394 = vmatpush1.msra.mxu0 0.0
        %1395 = vmatprep.subr.mxu0 0.0
        %1396 = vmatpush1.msra.mxu0 0.0
        %1397 = vmatprep.subr.mxu0 0.0
        %1398 = vmatpush1.msra.mxu0 0.0
        %1399 = vmatprep.subr.mxu0 0.0
        %1400 = vmatpush1.msra.mxu0 0.0
        %1401 = vmatprep.subr.mxu0 0.0
        %1402 = vmatpush1.msra.mxu0 0.0
        %1403 = vmatprep.subr.mxu0 0.0
        %1404 = vmatpush1.msra.mxu0 0.0
        %1405 = vmatprep.subr.mxu0 0.0
        %1406 = vmatpush1.msra.mxu0 0.0
        %1407 = vmatprep.subr.mxu0 0.0
        %1408 = vmatpush1.msra.mxu0 0.0
        %1409 = vmatprep.subr.mxu0 0.0
        %1410 = vmatpush1.msra.mxu0 0.0
        %1411 = vmatprep.subr.mxu0 0.0
        %1412 = vmatpush1.msra.mxu0 0.0
        %1413 = vmatprep.subr.mxu0 0.0
        %1414 = vmatpush1.msra.mxu0 0.0
        %1415 = vmatprep.subr.mxu0 0.0
        %1416 = vmatpush1.msra.mxu0 0.0
        %1417 = vmatprep.subr.mxu0 0.0
        %1418 = vmatpush1.msra.mxu0 0.0
        %1419 = vmatprep.mubr.f32.mxu0 0.0
        %1420 = vmatmul.mubr.f32.gmra.mrb[0].mxu0 %v1353
        %v1421 = vpop.f32.mrb[0].mxu0
        %v1422 = vadd.f32 %v1351, %v1421
        %v1423 = vpop.f32.mrb[0].mxu0
        %1424 = vdwg.mxu0
        %v1425 = vlaneseq
        %v1426 = vshrl.u32 %v1425, 7
        %v1427 = vsub.s32 0, %v1426
        %v1428 = vrot.slane %v1345, %v1427
        %1429 = vmatprep.subr.mxu0 0.0
        %1430 = vmatpush1.msra.mxu0 %v1342
        %1431 = vmatprep.subr.mxu0 0.0
        %1432 = vmatpush1.msra.mxu0 %v1343
        %1433 = vmatprep.subr.mxu0 0.0
        %1434 = vmatpush1.msra.mxu0 %v1344
        %1435 = vmatprep.subr.mxu0 0.0
        %1436 = vmatpush1.msra.mxu0 0.0
        %1437 = vmatprep.subr.mxu0 0.0
        %1438 = vmatpush1.msra.mxu0 0.0
        %1439 = vmatprep.subr.mxu0 0.0
        %1440 = vmatpush1.msra.mxu0 0.0
        %1441 = vmatprep.subr.mxu0 0.0
        %1442 = vmatpush1.msra.mxu0 0.0
        %1443 = vmatprep.subr.mxu0 0.0
        %1444 = vmatpush1.msra.mxu0 0.0
        %1445 = vmatprep.subr.mxu0 0.0
        %1446 = vmatpush1.msra.mxu0 0.0
        %1447 = vmatprep.subr.mxu0 0.0
        %1448 = vmatpush1.msra.mxu0 0.0
        %1449 = vmatprep.subr.mxu0 0.0
        %1450 = vmatpush1.msra.mxu0 0.0
        %1451 = vmatprep.subr.mxu0 0.0
        %1452 = vmatpush1.msra.mxu0 0.0
        %1453 = vmatprep.subr.mxu0 0.0
        %1454 = vmatpush1.msra.mxu0 0.0
        %1455 = vmatprep.subr.mxu0 0.0
        %1456 = vmatpush1.msra.mxu0 0.0
        %1457 = vmatprep.subr.mxu0 0.0
        %1458 = vmatpush1.msra.mxu0 0.0
        %1459 = vmatprep.subr.mxu0 0.0
        %1460 = vmatpush1.msra.mxu0 0.0
        %1461 = vmatprep.subr.mxu0 0.0
        %1462 = vmatpush1.msra.mxu0 0.0
        %1463 = vmatprep.subr.mxu0 0.0
        %1464 = vmatpush1.msra.mxu0 0.0
        %1465 = vmatprep.subr.mxu0 0.0
        %1466 = vmatpush1.msra.mxu0 0.0
        %1467 = vmatprep.subr.mxu0 0.0
        %1468 = vmatpush1.msra.mxu0 0.0
        %1469 = vmatprep.subr.mxu0 0.0
        %1470 = vmatpush1.msra.mxu0 0.0
        %1471 = vmatprep.subr.mxu0 0.0
        %1472 = vmatpush1.msra.mxu0 0.0
        %1473 = vmatprep.subr.mxu0 0.0
        %1474 = vmatpush1.msra.mxu0 0.0
        %1475 = vmatprep.subr.mxu0 0.0
        %1476 = vmatpush1.msra.mxu0 0.0
        %1477 = vmatprep.subr.mxu0 0.0
        %1478 = vmatpush1.msra.mxu0 0.0
        %1479 = vmatprep.subr.mxu0 0.0
        %1480 = vmatpush1.msra.mxu0 0.0
        %1481 = vmatprep.subr.mxu0 0.0
        %1482 = vmatpush1.msra.mxu0 0.0
        %1483 = vmatprep.subr.mxu0 0.0
        %1484 = vmatpush1.msra.mxu0 0.0
        %1485 = vmatprep.subr.mxu0 0.0
        %1486 = vmatpush1.msra.mxu0 0.0
        %1487 = vmatprep.subr.mxu0 0.0
        %1488 = vmatpush1.msra.mxu0 0.0
        %1489 = vmatprep.subr.mxu0 0.0
        %1490 = vmatpush1.msra.mxu0 0.0
        %1491 = vmatprep.subr.mxu0 0.0
        %1492 = vmatpush1.msra.mxu0 0.0
        %1493 = vmatprep.mubr.f32.mxu0 0.0
        %1494 = vmatmul.mubr.f32.gmra.mrb[0].mxu0 %v1353
        %v1495 = vpop.f32.mrb[0].mxu0
        %v1496 = vadd.f32 %v1428, %v1495
        %v1497 = vpop.f32.mrb[0].mxu0
        %1498 = vdwg.mxu0
        %v1500 = vcombine.high %v1496, %v1496
        %v1502 = vunpack.c.l.s4 1966171168
        %v1503 = vunpack.c.0.s8 %v1502
        %v1504 = vlaneseq
        %v1505 = vshrl.u32 %v1504, 7
        %v1506 = vsub.s32 %v1503, %v1505
        %v1507 = vrot.slane %v1496, %v1506
        %v1509 = vunpack.c.l.s4 1966171168
        %v1510 = vunpack.c.0.s8 %v1509
        %v1511 = vlaneseq
        %v1512 = vshrl.u32 %v1511, 7
        %v1513 = vsub.s32 %v1510, %v1512
        %v1514 = vrot.slane %v1500, %v1513
        %v1515 = vcombine.high %v1507, %v1507
        %v1516 = vcombine.high %v1514, %v1514
        %v1518 = vunpack.c.l.s4 1966171168
        %v1519 = vunpack.c.0.s8 %v1518
        %v1520 = vlaneseq
        %v1521 = vshrl.u32 %v1520, 7
        %v1522 = vsub.s32 %v1519, %v1521
        %v1523 = vrot.slane %v1507, %v1522
        %v1525 = vunpack.c.l.s4 1966171168
        %v1526 = vunpack.c.0.s8 %v1525
        %v1527 = vlaneseq
        %v1528 = vshrl.u32 %v1527, 7
        %v1529 = vsub.s32 %v1526, %v1528
        %v1530 = vrot.slane %v1514, %v1529
        %v1532 = vunpack.c.l.s4 1966171168
        %v1533 = vunpack.c.0.s8 %v1532
        %v1534 = vlaneseq
        %v1535 = vshrl.u32 %v1534, 7
        %v1536 = vsub.s32 %v1533, %v1535
        %v1537 = vrot.slane %v1515, %v1536
        %v1539 = vunpack.c.l.s4 1966171168
        %v1540 = vunpack.c.0.s8 %v1539
        %v1541 = vlaneseq
        %v1542 = vshrl.u32 %v1541, 7
        %v1543 = vsub.s32 %v1540, %v1542
        %v1544 = vrot.slane %v1516, %v1543
        %v1545 = vcombine.high %v1523, %v1523
        %v1546 = vcombine.high %v1530, %v1530
        %v1547 = vcombine.high %v1537, %v1537
        %v1548 = vcombine.high %v1544, %v1544
        %v1549 = vlaneseq
        %v1550 = vshrl.u32 %v1549, 7
        %v1551 = vsub.s32 0, %v1550
        %v1552 = vrot.slane %v1523, %v1551
        %v1553 = vlaneseq
        %v1554 = vshrl.u32 %v1553, 7
        %v1555 = vsub.s32 0, %v1554
        %v1556 = vrot.slane %v1537, %v1555
        %v1557 = vlaneseq
        %v1558 = vshrl.u32 %v1557, 7
        %v1559 = vsub.s32 0, %v1558
        %v1560 = vrot.slane %v1545, %v1559
        %v1561 = vlaneseq
        %v1562 = vshrl.u32 %v1561, 7
        %v1563 = vsub.s32 0, %v1562
        %v1564 = vrot.slane %v1547, %v1563
        %v1565 = vlaneseq
        %v1566 = vshrl.u32 %v1565, 7
        %v1567 = vsub.s32 0, %v1566
        %v1568 = vrot.slane %v1530, %v1567
        %v1569 = vlaneseq
        %v1570 = vshrl.u32 %v1569, 7
        %v1571 = vsub.s32 0, %v1570
        %v1572 = vrot.slane %v1544, %v1571
        %v1573 = vlaneseq
        %v1574 = vshrl.u32 %v1573, 7
        %v1575 = vsub.s32 0, %v1574
        %v1576 = vrot.slane %v1546, %v1575
        %v1577 = vlaneseq
        %v1578 = vshrl.u32 %v1577, 7
        %v1579 = vsub.s32 0, %v1578
        %v1580 = vrot.slane %v1548, %v1579
        %v1589 = vadd.f32 %v1552, %v1422
        %v1590 = vadd.f32 %v1556, %v1422
        %v1591 = vadd.f32 %v1560, %v1422
        %v1592 = vadd.f32 %v1564, %v1422
        %v1593 = vadd.f32 %v1568, %v1422
        %v1594 = vadd.f32 %v1572, %v1422
        %v1595 = vadd.f32 %v1576, %v1422
        %v1596 = vadd.f32 %v1580, %v1422
        %v1597 = vadd.f32 %v1589, %v1227
        %v1598 = vadd.f32 %v1590, %v1232
        %v1599 = vadd.f32 %v1591, %v1237
        %v1600 = vadd.f32 %v1592, %v1242
        %v1601 = vadd.f32 %v1593, %v1247
        %v1602 = vadd.f32 %v1594, %v1252
        %v1603 = vadd.f32 %v1595, %v1257
        %v1604 = vadd.f32 %v1596, %v1262
        %vm1605 = vcmp.gt.f32.partialorder %v1597, 0.0
        %vm1606 = vcmp.gt.f32.partialorder %v1598, 0.0
        %vm1607 = vcmp.gt.f32.partialorder %v1599, 0.0
        %vm1608 = vcmp.gt.f32.partialorder %v1600, 0.0
        %vm1609 = vcmp.gt.f32.partialorder %v1601, 0.0
        %vm1610 = vcmp.gt.f32.partialorder %v1602, 0.0
        %vm1611 = vcmp.gt.f32.partialorder %v1603, 0.0
        %vm1612 = vcmp.gt.f32.partialorder %v1604, 0.0
        %v1613 = vmul.f32 %v1597, 0.2
        %v1614 = vmul.f32 %v1598, 0.2
        %v1615 = vmul.f32 %v1599, 0.2
        %v1616 = vmul.f32 %v1600, 0.2
        %v1617 = vmul.f32 %v1601, 0.2
        %v1618 = vmul.f32 %v1602, 0.2
        %v1619 = vmul.f32 %v1603, 0.2
        %v1620 = vmul.f32 %v1604, 0.2
        %v1621 = vsel %vm1605, %v1597, %v1613
        %v1622 = vsel %vm1606, %v1598, %v1614
        %v1623 = vsel %vm1607, %v1599, %v1615
        %v1624 = vsel %vm1608, %v1600, %v1616
        %v1625 = vsel %vm1609, %v1601, %v1617
        %v1626 = vsel %vm1610, %v1602, %v1618
        %v1627 = vsel %vm1611, %v1603, %v1619
        %v1628 = vsel %vm1612, %v1604, %v1620
        %v1629 = vlaneseq
        %v1630 = vshrl.u32 %v1629, 7
        %v1631 = vsub.s32 0, %v1630
        %v1632 = vrot.slane %v1346, %v1631
        %v1633 = vmul.f32 %v1621, %v1632
        %v1634 = vmul.f32 %v1622, %v1632
        %v1635 = vmul.f32 %v1623, %v1632
        %v1636 = vmul.f32 %v1624, %v1632
        %v1637 = vmul.f32 %v1625, %v1632
        %v1638 = vmul.f32 %v1626, %v1632
        %v1639 = vmul.f32 %v1627, %v1632
        %v1640 = vmul.f32 %v1628, %v1632
        %vm1641 = vcmask 293888
        %v1642 = vsel %vm1641, %v1633, 0.0
        %1643 = vadd.xlane.f32.xlu0 %v1642
        %v1644 = vpop.xlane.xlu0 %1643
        %v1645 = vsel %vm1641, %v1634, 0.0
        %1646 = vadd.xlane.f32.xlu0 %v1645
        %v1647 = vpop.xlane.xlu0 %1646
        %v1648 = vsel %vm1641, %v1635, 0.0
        %1649 = vadd.xlane.f32.xlu0 %v1648
        %v1650 = vpop.xlane.xlu0 %1649
        %v1651 = vsel %vm1641, %v1636, 0.0
        %1652 = vadd.xlane.f32.xlu0 %v1651
        %v1653 = vpop.xlane.xlu0 %1652
        %v1654 = vsel %vm1641, %v1637, 0.0
        %1655 = vadd.xlane.f32.xlu0 %v1654
        %v1656 = vpop.xlane.xlu0 %1655
        %v1657 = vsel %vm1641, %v1638, 0.0
        %1658 = vadd.xlane.f32.xlu0 %v1657
        %v1659 = vpop.xlane.xlu0 %1658
        %v1660 = vsel %vm1641, %v1639, 0.0
        %1661 = vadd.xlane.f32.xlu0 %v1660
        %v1662 = vpop.xlane.xlu0 %1661
        %v1663 = vsel %vm1641, %v1640, 0.0
        %1664 = vadd.xlane.f32.xlu0 %v1663
        %v1665 = vpop.xlane.xlu0 %1664
        %v1666 = vadd.f32 %v1496, %v1422
        %v1667 = vadd.f32 %v1666, %v1337
        %vm1668 = vcmp.gt.f32.partialorder %v1667, 0.0
        %v1669 = vmul.f32 %v1667, 0.2
        %v1670 = vsel %vm1668, %v1667, %v1669
        %v1671 = vmul.f32 %v1670, %v1632
        %v1672 = vsel %vm1641, %v1671, 0.0
        %1673 = vadd.xlane.f32.xlu0 %v1672
        %v1674 = vpop.xlane.xlu0 %1673
        %v1683 = vlaneseq
        %v1684 = vshrl.u32 %v1683, 7
        %v1685 = vsub.s32 %v436, %v1684
        %v1686 = vrot.slane %v1644, %v1685
        %v1687 = vlaneseq
        %v1688 = vshrl.u32 %v1687, 7
        %v1689 = vsub.s32 %v436, %v1688
        %v1690 = vrot.slane %v1647, %v1689
        %v1691 = vlaneseq
        %v1692 = vshrl.u32 %v1691, 7
        %v1693 = vsub.s32 %v436, %v1692
        %v1694 = vrot.slane %v1650, %v1693
        %v1695 = vlaneseq
        %v1696 = vshrl.u32 %v1695, 7
        %v1697 = vsub.s32 %v436, %v1696
        %v1698 = vrot.slane %v1653, %v1697
        %v1699 = vlaneseq
        %v1700 = vshrl.u32 %v1699, 7
        %v1701 = vsub.s32 %v436, %v1700
        %v1702 = vrot.slane %v1656, %v1701
        %v1703 = vlaneseq
        %v1704 = vshrl.u32 %v1703, 7
        %v1705 = vsub.s32 %v436, %v1704
        %v1706 = vrot.slane %v1659, %v1705
        %v1707 = vlaneseq
        %v1708 = vshrl.u32 %v1707, 7
        %v1709 = vsub.s32 %v436, %v1708
        %v1710 = vrot.slane %v1662, %v1709
        %v1711 = vlaneseq
        %v1712 = vshrl.u32 %v1711, 7
        %v1713 = vsub.s32 %v436, %v1712
        %v1714 = vrot.slane %v1665, %v1713
        %v1715 = vsel %vm585, %v1690, %v1686
        %v1716 = vsel %vm587, %v1694, %v1715
        %v1717 = vsel %vm589, %v1698, %v1716
        %v1718 = vsel %vm591, %v1702, %v1717
        %v1719 = vsel %vm593, %v1706, %v1718
        %v1720 = vsel %vm595, %v1710, %v1719
        %v1721 = vsel %vm597, %v1714, %v1720
        %v1723 = vsel %vm1011, %v1721, -1e+30
        %v1724 = vsel %vm437, %v1674, %v1723
        %v1725 = vsel %vm423, %v1724, -inf
        %1726 = vmax.xlane.f32.xlu0 %v1725
        %v1727 = vpop.xlane.xlu0 %1726
        %v1728 = vsub.f32 %v1724, %v1727
        %v1729 = vmul.f32 %v1728, 1.442695
        %v1730 = vpow.pop %v1729
        %v1731 = vsel %vm423, %v1730, 0.0
        %1732 = vadd.xlane.f32.xlu0 %v1731
        %v1733 = vpop.xlane.xlu0 %1732
        %v1734 = vrcp.pop %v1733
        %v1735 = vmul.f32 %v1730, %v1734
        %v1736 = vlaneseq
        %v1737 = vshrl.u32 %v1736, 7
        %v1738 = vsub.s32 0, %v1737
        %v1739 = vrot.slane %v1347, %v1738
        %v1741 = vsel %vm423, %v1735, 0
        %1743 = vmatprep.subr.mxu0 0.0
        %1744 = vmatpush1.msra.mxu0 %v1422
        %1745 = vmatprep.subr.mxu0 0.0
        %1746 = vmatpush1.msra.mxu0 0.0
        %1747 = vmatprep.subr.mxu0 0.0
        %1748 = vmatpush1.msra.mxu0 0.0
        %1749 = vmatprep.subr.mxu0 0.0
        %1750 = vmatpush1.msra.mxu0 0.0
        %1751 = vmatprep.subr.mxu0 0.0
        %1752 = vmatpush1.msra.mxu0 0.0
        %1753 = vmatprep.subr.mxu0 0.0
        %1754 = vmatpush1.msra.mxu0 0.0
        %1755 = vmatprep.subr.mxu0 0.0
        %1756 = vmatpush1.msra.mxu0 0.0
        %1757 = vmatprep.subr.mxu0 0.0
        %1758 = vmatpush1.msra.mxu0 0.0
        %1759 = vmatprep.subr.mxu0 0.0
        %1760 = vmatpush1.msra.mxu0 0.0
        %1761 = vmatprep.subr.mxu0 0.0
        %1762 = vmatpush1.msra.mxu0 0.0
        %1763 = vmatprep.subr.mxu0 0.0
        %1764 = vmatpush1.msra.mxu0 0.0
        %1765 = vmatprep.subr.mxu0 0.0
        %1766 = vmatpush1.msra.mxu0 0.0
        %1767 = vmatprep.subr.mxu0 0.0
        %1768 = vmatpush1.msra.mxu0 0.0
        %1769 = vmatprep.subr.mxu0 0.0
        %1770 = vmatpush1.msra.mxu0 0.0
        %1771 = vmatprep.subr.mxu0 0.0
        %1772 = vmatpush1.msra.mxu0 0.0
        %1773 = vmatprep.subr.mxu0 0.0
        %1774 = vmatpush1.msra.mxu0 0.0
        %1775 = vmatprep.subr.mxu0 0.0
        %1776 = vmatpush1.msra.mxu0 0.0
        %1777 = vmatprep.subr.mxu0 0.0
        %1778 = vmatpush1.msra.mxu0 0.0
        %1779 = vmatprep.subr.mxu0 0.0
        %1780 = vmatpush1.msra.mxu0 0.0
        %1781 = vmatprep.subr.mxu0 0.0
        %1782 = vmatpush1.msra.mxu0 0.0
        %1783 = vmatprep.subr.mxu0 0.0
        %1784 = vmatpush1.msra.mxu0 0.0
        %1785 = vmatprep.subr.mxu0 0.0
        %1786 = vmatpush1.msra.mxu0 0.0
        %1787 = vmatprep.subr.mxu0 0.0
        %1788 = vmatpush1.msra.mxu0 0.0
        %1789 = vmatprep.subr.mxu0 0.0
        %1790 = vmatpush1.msra.mxu0 0.0
        %1791 = vmatprep.subr.mxu0 0.0
        %1792 = vmatpush1.msra.mxu0 0.0
        %1793 = vmatprep.subr.mxu0 0.0
        %1794 = vmatpush1.msra.mxu0 0.0
        %1795 = vmatprep.subr.mxu0 0.0
        %1796 = vmatpush1.msra.mxu0 0.0
        %1797 = vmatprep.subr.mxu0 0.0
        %1798 = vmatpush1.msra.mxu0 0.0
        %1799 = vmatprep.subr.mxu0 0.0
        %1800 = vmatpush1.msra.mxu0 0.0
        %1801 = vmatprep.subr.mxu0 0.0
        %1802 = vmatpush1.msra.mxu0 0.0
        %1803 = vmatprep.subr.mxu0 0.0
        %1804 = vmatpush1.msra.mxu0 0.0
        %1805 = vmatprep.subr.mxu0 0.0
        %1806 = vmatpush1.msra.mxu0 0.0
        %1807 = vmatprep.mubr.f32.mxu0 0.0
        %1808 = vmatmul.mubr.f32.gmra.mrb[0].mxu0 %v1741
        %v1809 = vpop.f32.mrb[0].mxu0
        %v1810 = vadd.f32 %v1739, %v1809
        %v1811 = vpop.f32.mrb[0].mxu0
        %1812 = vdwg.mxu0
        %v1813 = vmax.f32 %v1810, 0.0
        %v1814 = vld [vmem:[%s260] sm:$0x1]
        %vm1815 = vcmask 57344
        %v1816 = vsel %vm1815, %v1814, 0.0
        %1817 = vadd.xlane.f32.xlu0 %v1816
        %v1818 = vpop.xlane.xlu0 %1817
        %v1819 = vmax.f32 %v1818, 1.0
        %v1821 = vsel %vm423, %v1814, 0
        %1823 = vmatprep.subr.mxu0 0.0
        %1824 = vmatpush1.msra.mxu0 %v1813
        %1825 = vmatprep.subr.mxu0 0.0
        %1826 = vmatpush1.msra.mxu0 0.0
        %1827 = vmatprep.subr.mxu0 0.0
        %1828 = vmatpush1.msra.mxu0 0.0
        %1829 = vmatprep.subr.mxu0 0.0
        %1830 = vmatpush1.msra.mxu0 0.0
        %1831 = vmatprep.subr.mxu0 0.0
        %1832 = vmatpush1.msra.mxu0 0.0
        %1833 = vmatprep.subr.mxu0 0.0
        %1834 = vmatpush1.msra.mxu0 0.0
        %1835 = vmatprep.subr.mxu0 0.0
        %1836 = vmatpush1.msra.mxu0 0.0
        %1837 = vmatprep.subr.mxu0 0.0
        %1838 = vmatpush1.msra.mxu0 0.0
        %1839 = vmatprep.subr.mxu0 0.0
        %1840 = vmatpush1.msra.mxu0 0.0
        %1841 = vmatprep.subr.mxu0 0.0
        %1842 = vmatpush1.msra.mxu0 0.0
        %1843 = vmatprep.subr.mxu0 0.0
        %1844 = vmatpush1.msra.mxu0 0.0
        %1845 = vmatprep.subr.mxu0 0.0
        %1846 = vmatpush1.msra.mxu0 0.0
        %1847 = vmatprep.subr.mxu0 0.0
        %1848 = vmatpush1.msra.mxu0 0.0
        %1849 = vmatprep.subr.mxu0 0.0
        %1850 = vmatpush1.msra.mxu0 0.0
        %1851 = vmatprep.subr.mxu0 0.0
        %1852 = vmatpush1.msra.mxu0 0.0
        %1853 = vmatprep.subr.mxu0 0.0
        %1854 = vmatpush1.msra.mxu0 0.0
        %1855 = vmatprep.subr.mxu0 0.0
        %1856 = vmatpush1.msra.mxu0 0.0
        %1857 = vmatprep.subr.mxu0 0.0
        %1858 = vmatpush1.msra.mxu0 0.0
        %1859 = vmatprep.subr.mxu0 0.0
        %1860 = vmatpush1.msra.mxu0 0.0
        %1861 = vmatprep.subr.mxu0 0.0
        %1862 = vmatpush1.msra.mxu0 0.0
        %1863 = vmatprep.subr.mxu0 0.0
        %1864 = vmatpush1.msra.mxu0 0.0
        %1865 = vmatprep.subr.mxu0 0.0
        %1866 = vmatpush1.msra.mxu0 0.0
        %1867 = vmatprep.subr.mxu0 0.0
        %1868 = vmatpush1.msra.mxu0 0.0
        %1869 = vmatprep.subr.mxu0 0.0
        %1870 = vmatpush1.msra.mxu0 0.0
        %1871 = vmatprep.subr.mxu0 0.0
        %1872 = vmatpush1.msra.mxu0 0.0
        %1873 = vmatprep.subr.mxu0 0.0
        %1874 = vmatpush1.msra.mxu0 0.0
        %1875 = vmatprep.subr.mxu0 0.0
        %1876 = vmatpush1.msra.mxu0 0.0
        %1877 = vmatprep.subr.mxu0 0.0
        %1878 = vmatpush1.msra.mxu0 0.0
        %1879 = vmatprep.subr.mxu0 0.0
        %1880 = vmatpush1.msra.mxu0 0.0
        %1881 = vmatprep.subr.mxu0 0.0
        %1882 = vmatpush1.msra.mxu0 0.0
        %1883 = vmatprep.subr.mxu0 0.0
        %1884 = vmatpush1.msra.mxu0 0.0
        %1885 = vmatprep.subr.mxu0 0.0
        %1886 = vmatpush1.msra.mxu0 0.0
        %1887 = vmatprep.mubr.f32.mxu0 0.0
        %1888 = vmatmul.mubr.f32.gmra.mrb[0].mxu0 %v1821
        %v1889 = vpop.f32.mrb[0].mxu0
        %v1890 = vadd.f32 0.0, %v1889
        %v1891 = vpop.f32.mrb[0].mxu0
        %1892 = vdwg.mxu0
        %v1893 = vrcp.pop %v1819
        %v1894 = vmul.f32 %v1890, %v1893
        %v1895 = vld [vmem:[%s4 + $0xe0] sm:$0xff]
        %v1896 = vld [vmem:[%s4 + $0xe8] sm:$0xff]
        %v1897 = vld [vmem:[%s4 + $0xf0] sm:$0xff]
        %v1898 = vld [vmem:[%s4 + $0xf8] sm:$0xff]
        %v1899 = vld [vmem:[%s4 + $0x100] sm:$0xf]
        %v1900 = vld [vmem:[%s4 + $0x108] sm:$0x1]
        %v1902 = vsel %vm1641, %v1894, 0
        %v1905 = vsel %vm468, %v1899, 0
        %1907 = vmatprep.subr.mxu0 0.0
        %1908 = vmatpush1.msra.mxu0 %v1895
        %1909 = vmatprep.subr.mxu0 0.0
        %1910 = vmatpush1.msra.mxu0 %v1896
        %1911 = vmatprep.subr.mxu0 0.0
        %1912 = vmatpush1.msra.mxu0 %v1897
        %1913 = vmatprep.subr.mxu0 0.0
        %1914 = vmatpush1.msra.mxu0 %v1898
        %1915 = vmatprep.subr.mxu0 0.0
        %1916 = vmatpush1.msra.mxu0 %v1905
        %1917 = vmatprep.subr.mxu0 0.0
        %1918 = vmatpush1.msra.mxu0 0.0
        %1919 = vmatprep.subr.mxu0 0.0
        %1920 = vmatpush1.msra.mxu0 0.0
        %1921 = vmatprep.subr.mxu0 0.0
        %1922 = vmatpush1.msra.mxu0 0.0
        %1923 = vmatprep.subr.mxu0 0.0
        %1924 = vmatpush1.msra.mxu0 0.0
        %1925 = vmatprep.subr.mxu0 0.0
        %1926 = vmatpush1.msra.mxu0 0.0
        %1927 = vmatprep.subr.mxu0 0.0
        %1928 = vmatpush1.msra.mxu0 0.0
        %1929 = vmatprep.subr.mxu0 0.0
        %1930 = vmatpush1.msra.mxu0 0.0
        %1931 = vmatprep.subr.mxu0 0.0
        %1932 = vmatpush1.msra.mxu0 0.0
        %1933 = vmatprep.subr.mxu0 0.0
        %1934 = vmatpush1.msra.mxu0 0.0
        %1935 = vmatprep.subr.mxu0 0.0
        %1936 = vmatpush1.msra.mxu0 0.0
        %1937 = vmatprep.subr.mxu0 0.0
        %1938 = vmatpush1.msra.mxu0 0.0
        %1939 = vmatprep.subr.mxu0 0.0
        %1940 = vmatpush1.msra.mxu0 0.0
        %1941 = vmatprep.subr.mxu0 0.0
        %1942 = vmatpush1.msra.mxu0 0.0
        %1943 = vmatprep.subr.mxu0 0.0
        %1944 = vmatpush1.msra.mxu0 0.0
        %1945 = vmatprep.subr.mxu0 0.0
        %1946 = vmatpush1.msra.mxu0 0.0
        %1947 = vmatprep.subr.mxu0 0.0
        %1948 = vmatpush1.msra.mxu0 0.0
        %1949 = vmatprep.subr.mxu0 0.0
        %1950 = vmatpush1.msra.mxu0 0.0
        %1951 = vmatprep.subr.mxu0 0.0
        %1952 = vmatpush1.msra.mxu0 0.0
        %1953 = vmatprep.subr.mxu0 0.0
        %1954 = vmatpush1.msra.mxu0 0.0
        %1955 = vmatprep.subr.mxu0 0.0
        %1956 = vmatpush1.msra.mxu0 0.0
        %1957 = vmatprep.subr.mxu0 0.0
        %1958 = vmatpush1.msra.mxu0 0.0
        %1959 = vmatprep.subr.mxu0 0.0
        %1960 = vmatpush1.msra.mxu0 0.0
        %1961 = vmatprep.subr.mxu0 0.0
        %1962 = vmatpush1.msra.mxu0 0.0
        %1963 = vmatprep.subr.mxu0 0.0
        %1964 = vmatpush1.msra.mxu0 0.0
        %1965 = vmatprep.subr.mxu0 0.0
        %1966 = vmatpush1.msra.mxu0 0.0
        %1967 = vmatprep.subr.mxu0 0.0
        %1968 = vmatpush1.msra.mxu0 0.0
        %1969 = vmatprep.subr.mxu0 0.0
        %1970 = vmatpush1.msra.mxu0 0.0
        %1971 = vmatprep.mubr.f32.mxu0 0.0
        %1972 = vmatmul.mubr.f32.gmra.mrb[0].mxu0 %v1902
        %v1973 = vpop.f32.mrb[0].mxu0
        %v1974 = vadd.f32 %v1900, %v1973
        %v1975 = vpop.f32.mrb[0].mxu0
        %1976 = vdwg.mxu0
        %vm1977 = vcmask 516096
        %1978 = vst.msk [vmem:[%s253] sm:$0x1] %vm1977, %v1974
        %s1979 = sand.u32 %s152, 1
        %s1980 = scalar_lea.sflag [#allocation3], %s1979
        %s1981 = sand.u32 %s152, 1
        %s1982 = scalar_lea.vmem [#allocation2], %s1981
        // Predicated region
        $region41: #{graph_encoder_forward.1} parent=39 // pred_check
          %p1983 = pneg %p162
        $region42: #{graph_encoder_forward.1} parent=39 // pred_check_branch
          %1985 = sbr.rel (%p1983) target = $region44
        $region43: #{graph_encoder_forward.1} parent=39 // pred_region
          %s1987 = ssub.s32 16, 16
          %1988 = vsyncadd %s1980, %s1987
          %s1989 = smul.addr %s19, 16
          %s1990 = scalar_lea.hbm %s5, %s1989
          %s1992 = sshll.u32 %s1982, 4
          %s1993 = int_to_ptr.vmem [resolvable:$true] %s1992
          %1995 = dma.vmem_to_hbm [thread:$0]  %s1993, 16, %s1990, %s1980
        $region44: #{graph_encoder_forward.1} parent=39 // pred_fallthru
          _
      $region40: #{graph_encoder_forward.1} parent=5 // pred_fallthru
        _
      %p1996 = scmp.le.s32.totalorder 2, %s14
      // Predicated region
      $region45: #{graph_encoder_forward.1} parent=5 // pred_check
        %p1997 = pneg %p1996
      $region46: #{graph_encoder_forward.1} parent=5 // pred_check_branch
        %1999 = sbr.rel (%p1997) target = $region48
      $region47: #{graph_encoder_forward.1} parent=5 // pred_region
        %s2000 = ssub.s32 %s14, 2
        // Predicated region
        $region49: #{graph_encoder_forward.1} parent=47 // pred_check
          %p2001 = pneg %p168
        $region50: #{graph_encoder_forward.1} parent=47 // pred_check_branch
          %2003 = sbr.rel (%p2001) target = $region52
        $region51: #{graph_encoder_forward.1} parent=47 // pred_region
          %s2004 = sand.u32 %s153, 1
          %s2005 = scalar_lea.sflag [#allocation3], %s2004
          %s2006 = sand.u32 %s153, 1
          %s2007 = scalar_lea.vmem [#allocation2], %s2006
          %2008 = dma.done %s2005, 16
        $region52: #{graph_encoder_forward.1} parent=47 // pred_fallthru
          _
      $region48: #{graph_encoder_forward.1} parent=5 // pred_fallthru
        _
    $region6: #{graph_encoder_forward.1} parent=1 // loop_footer
      %s18 = sadd.s32 1, %s14
    $region7: #{graph_encoder_forward.1} parent=1 // loop_footer_branch
      %13 = sbr.rel target = $region3
    $region8: #{graph_encoder_forward.1} parent=1 // loop_exit
      _
    %2009 = vsyncpa [#allocation3], 1
    %s2010 = scalar_lea.sflag [#allocation3], 1
    %2011 = vsyncpa %s2010, 1

</llo_original>
